<compile_context>
chip_gen: v5e
topology: v5e:2x2
jax: 0.10.0
libtpu: 0.0.40
codegen_flags: <defaults>
</compile_context>

<pallas_src>
import jax
import jax.numpy as jnp
import numpy as np
from jax.experimental import pallas as pl
from jax.experimental.pallas import tpu as pltpu


# ----------------------------------------------------------------------------
# Fused Pallas kernel: LSTM stack + FC head
# ----------------------------------------------------------------------------
def make_fused_lstm_kernel(num_layers, seq_len, b_pad, hidden, c_pad):
    """Build the fused (LSTM stack + FC head) kernel for static shapes."""

    def kernel(*refs):
        x_ref = refs[0]                               # (T*Bp, I)
        layer_refs = refs[1:1 + 3 * num_layers]       # (w_ih, w_hh, bias) per layer
        fc_w_ref = refs[1 + 3 * num_layers]           # (H, Cp)   lane-padded
        fc_b_ref = refs[2 + 3 * num_layers]           # (1, Cp)   lane-padded
        out_ref = refs[3 + 3 * num_layers]            # (L, Bp, Cp)
        xw_a = refs[4 + 3 * num_layers]               # (T*Bp, 4H) VMEM scratch
        xw_b = refs[5 + 3 * num_layers]               # (T*Bp, 4H) VMEM scratch

        H = hidden
        Bp = b_pad

        # Hoisted input projection for layer 0 only: one (T*Bp, I) x (I, 4H)
        # matmul off the recurrence.  Layers >= 1 get their pre-activations
        # written step-by-step by the previous layer (lane-dense stores).
        w_ih0 = layer_refs[0][...]                    # (I, 4H) pre-transposed
        bias0 = layer_refs[2][...]                    # (1, 4H) = b_ih + b_hh
        xw_a[...] = (
            jnp.dot(x_ref[...], w_ih0, preferred_element_type=jnp.float32) + bias0
        )

        xw_scrs = [xw_a, xw_b]

        for l in range(num_layers):
            # NOTE(scaling): materializing w_hh / w_ih_nxt as values is ~9 vregs
            # total at H=32 (fine); for H >= 128 feed them from VMEM instead.
            w_hh = layer_refs[3 * l + 1][...]         # (H, 4H) pre-transposed
            xw_cur = xw_scrs[l % 2]
            xw_nxt = xw_scrs[(l + 1) % 2]

            last = (l == num_layers - 1)
            if not last:
                w_ih_nxt = layer_refs[3 * (l + 1)][...]       # (H, 4H)
                bias_nxt = layer_refs[3 * (l + 1) + 2][...]   # (1, 4H)

            h = jnp.zeros((Bp, H), jnp.float32)
            c = jnp.zeros((Bp, H), jnp.float32)

            for t in range(seq_len):                  # fully unrolled (T small)
                r0 = t * Bp                           # static, 8-aligned offset

                # Only h_{t-1} @ W_hh stays on the sequential path.
                gates = xw_cur[r0:r0 + Bp, :] + jnp.dot(
                    h, w_hh, preferred_element_type=jnp.float32)

                # Merged transcendentals: ONE sigmoid and ONE tanh over the full
                # (Bp, 4H) = (8, 128) vreg (EUP has a single bundle slot), then
                # static lane slices for gate extraction (XLU slot, dual-issues
                # with VPU/EUP).  PyTorch gate order: i, f, g, o.
                sg = jax.nn.sigmoid(gates)
                tg = jnp.tanh(gates)
                i = sg[:, 0 * H:1 * H]
                f = sg[:, 1 * H:2 * H]
                g = tg[:, 2 * H:3 * H]
                o = sg[:, 3 * H:4 * H]

                c = f * c + i * g
                h = o * jnp.tanh(c)

                if not last:
                    # Lane-dense (Bp, 4H) store of the NEXT layer's gate
                    # pre-activation; this matmul is off the h_{t+1} chain.
                    xw_nxt[r0:r0 + Bp, :] = (
                        jnp.dot(h, w_ih_nxt, preferred_element_type=jnp.float32)
                        + bias_nxt
                    )

            # FC head on this layer's final hidden state, lane-padded to Cp
            # (fc is row-wise, so per-layer fc == fc on concatenated h_out).
            out_ref[l] = (
                jnp.dot(h, fc_w_ref[...], preferred_element_type=jnp.float32)
                + fc_b_ref[...]
            ).astype(out_ref.dtype)

    return kernel


def _full_spec(shape):
    # Whole-array block (no grid): index_map takes no args.
    return pl.BlockSpec(shape, lambda: tuple(0 for _ in shape))


# ----------------------------------------------------------------------------
# Wrapper
# ----------------------------------------------------------------------------
def lstm_model_forward(x_bti, params):
    """Mirrors LSTM.forward: x (B, T, I) -> out (num_layers*B, num_classes)."""
    B, T, I = x_bti.shape
    L = len(params["lstm_layers"])
    H = params["lstm_layers"][0][1].shape[1]          # w_hh: (4H, H)
    C = params["fc_w"].shape[0]
    Bp = ((B + 7) // 8) * 8                           # pad batch to full sublanes
    Cp = max(((C + 127) // 128) * 128, 128)           # pad classes to full lanes

    # (B, T, I) -> time-major (T, Bp, I) -> (T*Bp, I); row index = t*Bp + b.
    x_tm = jnp.transpose(x_bti, (1, 0, 2)).astype(jnp.float32)
    x_tm = jnp.pad(x_tm, ((0, 0), (0, Bp - B), (0, 0)))
    x_flat = x_tm.reshape(T * Bp, I)

    kernel_inputs = [x_flat]
    for (w_ih, w_hh, b_ih, b_hh) in params["lstm_layers"]:
        kernel_inputs += [
            jnp.transpose(w_ih).astype(jnp.float32),            # (in, 4H)
            jnp.transpose(w_hh).astype(jnp.float32),            # (H, 4H)
            (b_ih + b_hh).reshape(1, -1).astype(jnp.float32),   # (1, 4H)
        ]
    fc_w_t = jnp.transpose(params["fc_w"]).astype(jnp.float32)  # (H, C)
    kernel_inputs += [
        jnp.pad(fc_w_t, ((0, 0), (0, Cp - C))),                            # (H, Cp)
        jnp.pad(params["fc_b"].reshape(1, -1).astype(jnp.float32),
                ((0, 0), (0, Cp - C))),                                    # (1, Cp)
    ]

    out = pl.pallas_call(
        make_fused_lstm_kernel(L, T, Bp, H, Cp),
        out_shape=jax.ShapeDtypeStruct((L, Bp, Cp), jnp.float32),
        in_specs=[_full_spec(a.shape) for a in kernel_inputs],
        out_specs=_full_spec((L, Bp, Cp)),
        scratch_shapes=[
            pltpu.VMEM((T * Bp, 4 * H), jnp.float32),  # layer-l gate pre-activations
            pltpu.VMEM((T * Bp, 4 * H), jnp.float32),  # layer-(l+1) gate pre-activations
        ],
        # Scaling guard (v7x has 64 MiB physical VMEM); current footprint is
        # tiny (~100 KiB).  For large T/B/H, chunk the projection over time.
        compiler_params=pltpu.CompilerParams(vmem_limit_bytes=32 * 1024 * 1024),
    )(*kernel_inputs)

    # h_out.view(-1, hidden) ordering = layer-major, then batch.
    return out[:, :B, :C].reshape(L * B, C)


# ----------------------------------------------------------------------------
# Pure-JAX reference (for correctness check)
# ----------------------------------------------------------------------------
def lstm_model_reference(x_bti, params):
    B = x_bti.shape[0]
    x = x_bti
    last_hiddens = []
    for (w_ih, w_hh, b_ih, b_hh) in params["lstm_layers"]:
        H = w_hh.shape[1]
        h = jnp.zeros((B, H), jnp.float32)
        c = jnp.zeros((B, H), jnp.float32)

        def step(carry, x_t):
            h, c = carry
            gates = x_t @ w_ih.T + h @ w_hh.T + b_ih + b_hh
            i = jax.nn.sigmoid(gates[:, 0 * H:1 * H])
            f = jax.nn.sigmoid(gates[:, 1 * H:2 * H])
            g = jnp.tanh(gates[:, 2 * H:3 * H])
            o = jax.nn.sigmoid(gates[:, 3 * H:4 * H])
            c = f * c + i * g
            h = o * jnp.tanh(c)
            return (h, c), h

        (h, c), hs = jax.lax.scan(step, (h, c), jnp.transpose(x, (1, 0, 2)))
        x = jnp.transpose(hs, (1, 0, 2))
        last_hiddens.append(h)
    h_out = jnp.concatenate(last_hiddens, axis=0)
    return h_out @ params["fc_w"].T + params["fc_b"]


# ----------------------------------------------------------------------------
# Deterministic parameter init (PyTorch nn.LSTM-style uniform(-1/sqrt(H), ...))
# ----------------------------------------------------------------------------
def init_params(key, num_classes, input_size, hidden_size, num_layers):
    params = {"lstm_layers": []}
    bound = 1.0 / np.sqrt(hidden_size)
    for layer in range(num_layers):
        in_sz = input_size if layer == 0 else hidden_size
        key, k1, k2, k3, k4 = jax.random.split(key, 5)
        w_ih = jax.random.uniform(k1, (4 * hidden_size, in_sz), jnp.float32, -bound, bound)
        w_hh = jax.random.uniform(k2, (4 * hidden_size, hidden_size), jnp.float32, -bound, bound)
        b_ih = jax.random.uniform(k3, (4 * hidden_size,), jnp.float32, -bound, bound)
        b_hh = jax.random.uniform(k4, (4 * hidden_size,), jnp.float32, -bound, bound)
        params["lstm_layers"].append((w_ih, w_hh, b_ih, b_hh))
    key, k5, k6 = jax.random.split(key, 3)
    fc_bound = 1.0 / np.sqrt(hidden_size)
    params["fc_w"] = jax.random.uniform(k5, (num_classes, hidden_size), jnp.float32, -fc_bound, fc_bound)
    params["fc_b"] = jax.random.uniform(k6, (1, num_classes), jnp.float32, -fc_bound, fc_bound)
    return params


if __name__ == "__main__":
    # Small shapes consistent with the module's forward
    num_classes, input_size, hidden_size, num_layers = 4, 8, 32, 2
    B, T = 2, 8

    key = jax.random.PRNGKey(0)
    key, kx = jax.random.split(key)
    x = jax.random.normal(kx, (B, T, input_size), jnp.float32)

    params = init_params(key, num_classes, input_size, hidden_size, num_layers)

    fwd = jax.jit(lstm_model_forward)
    out = jax.block_until_ready(fwd(x, params))

    ref = jax.block_until_ready(lstm_model_reference(x, params))

    assert out.shape == (num_layers * B, num_classes), out.shape
    np.testing.assert_allclose(np.asarray(out), np.asarray(ref), rtol=1e-4, atol=1e-4)

    print("KERNEL_OK")
</pallas_src>

<mosaic_0001>
module attributes {stable_mosaic.version = 11 : i64} {
  func.func @kernel(%arg0: memref<64x8xf32, #tpu.memory_space<vmem>>, %arg1: memref<8x128xf32, #tpu.memory_space<vmem>>, %arg2: memref<32x128xf32, #tpu.memory_space<vmem>>, %arg3: memref<1x128xf32, #tpu.memory_space<vmem>>, %arg4: memref<32x128xf32, #tpu.memory_space<vmem>>, %arg5: memref<32x128xf32, #tpu.memory_space<vmem>>, %arg6: memref<1x128xf32, #tpu.memory_space<vmem>>, %arg7: memref<32x128xf32, #tpu.memory_space<vmem>>, %arg8: memref<1x128xf32, #tpu.memory_space<vmem>>, %arg9: memref<2x8x128xf32, #tpu.memory_space<vmem>>, %arg10: memref<64x128xf32, #tpu.memory_space<vmem>>, %arg11: memref<64x128xf32, #tpu.memory_space<vmem>>) attributes {dimension_semantics = [], scalar_prefetch = 0 : i64, scratch_operands = 2 : i64, tpu.core_type = #tpu.core_type<tc>} {
    %c0 = arith.constant 0 : index
    %c0_0 = arith.constant 0 : index
    %0 = vector.load %arg1[%c0, %c0_0] : memref<8x128xf32, #tpu.memory_space<vmem>>, vector<8x128xf32>
    %c0_1 = arith.constant 0 : index
    %c0_2 = arith.constant 0 : index
    %1 = vector.load %arg3[%c0_1, %c0_2] : memref<1x128xf32, #tpu.memory_space<vmem>>, vector<1x128xf32>
    %c0_3 = arith.constant 0 : index
    %c0_4 = arith.constant 0 : index
    %2 = vector.load %arg0[%c0_3, %c0_4] : memref<64x8xf32, #tpu.memory_space<vmem>>, vector<64x8xf32>
    %cst = arith.constant dense<0.000000e+00> : vector<64x128xf32>
    %3 = tpu.matmul %2, %0, %cst {dimension_numbers = #tpu.dot_dimension_numbers<[1], [0], [0], [1], [0, 0, 1, 1], [], []>} : vector<64x8xf32>, vector<8x128xf32>, vector<64x128xf32> -> vector<64x128xf32>
    %4 = vector.broadcast %1 : vector<1x128xf32> to vector<64x128xf32>
    %5 = arith.addf %3, %4 : vector<64x128xf32>
    %c0_5 = arith.constant 0 : index
    %c0_6 = arith.constant 0 : index
    %6 = vector.load %arg10[%c0_5, %c0_6] : memref<64x128xf32, #tpu.memory_space<vmem>>, vector<64x128xf32>
    tpu.vector_store %arg10[%c0_5, %c0_6], %5 {strides = array<i32>} : memref<64x128xf32, #tpu.memory_space<vmem>>, vector<64x128xf32>,
    %c0_7 = arith.constant 0 : index
    %c0_8 = arith.constant 0 : index
    %7 = vector.load %arg2[%c0_7, %c0_8] : memref<32x128xf32, #tpu.memory_space<vmem>>, vector<32x128xf32>
    %c0_9 = arith.constant 0 : index
    %c0_10 = arith.constant 0 : index
    %8 = vector.load %arg4[%c0_9, %c0_10] : memref<32x128xf32, #tpu.memory_space<vmem>>, vector<32x128xf32>
    %c0_11 = arith.constant 0 : index
    %c0_12 = arith.constant 0 : index
    %9 = vector.load %arg6[%c0_11, %c0_12] : memref<1x128xf32, #tpu.memory_space<vmem>>, vector<1x128xf32>
    %cst_13 = arith.constant 0.000000e+00 : f32
    %10 = vector.broadcast %cst_13 : f32 to vector<8x32xf32>
    %cst_14 = arith.constant 0.000000e+00 : f32
    %11 = vector.broadcast %cst_14 : f32 to vector<8x32xf32>
    %c0_15 = arith.constant 0 : index
    %c0_16 = arith.constant 0 : index
    %12 = vector.load %arg10[%c0_15, %c0_16] : memref<64x128xf32, #tpu.memory_space<vmem>>, vector<8x128xf32>
    %cst_17 = arith.constant dense<0.000000e+00> : vector<8x128xf32>
    %13 = tpu.matmul %10, %7, %cst_17 {dimension_numbers = #tpu.dot_dimension_numbers<[1], [0], [0], [1], [0, 0, 1, 1], [], []>} : vector<8x32xf32>, vector<32x128xf32>, vector<8x128xf32> -> vector<8x128xf32>
    %14 = arith.addf %12, %13 : vector<8x128xf32>
    %15 = arith.negf %14 : vector<8x128xf32>
    %16 = math.exp %15 : vector<8x128xf32>
    %cst_18 = arith.constant 1.000000e+00 : f32
    %17 = vector.broadcast %cst_18 : f32 to vector<8x128xf32>
    %18 = arith.addf %17, %16 : vector<8x128xf32>
    %19 = arith.divf %17, %18 : vector<8x128xf32>
    %20 = math.tanh %14 : vector<8x128xf32>
    %21 = vector.extract_strided_slice %19 {offsets = [0, 0], sizes = [8, 32], strides = [1, 1]} : vector<8x128xf32> to vector<8x32xf32>
    %22 = vector.extract_strided_slice %19 {offsets = [0, 32], sizes = [8, 32], strides = [1, 1]} : vector<8x128xf32> to vector<8x32xf32>
    %23 = vector.extract_strided_slice %20 {offsets = [0, 64], sizes = [8, 32], strides = [1, 1]} : vector<8x128xf32> to vector<8x32xf32>
    %24 = vector.extract_strided_slice %19 {offsets = [0, 96], sizes = [8, 32], strides = [1, 1]} : vector<8x128xf32> to vector<8x32xf32>
    %25 = arith.mulf %22, %11 : vector<8x32xf32>
    %26 = arith.mulf %21, %23 : vector<8x32xf32>
    %27 = arith.addf %25, %26 : vector<8x32xf32>
    %28 = math.tanh %27 : vector<8x32xf32>
    %29 = arith.mulf %24, %28 : vector<8x32xf32>
    %cst_19 = arith.constant dense<0.000000e+00> : vector<8x128xf32>
    %30 = tpu.matmul %29, %8, %cst_19 {dimension_numbers = #tpu.dot_dimension_numbers<[1], [0], [0], [1], [0, 0, 1, 1], [], []>} : vector<8x32xf32>, vector<32x128xf32>, vector<8x128xf32> -> vector<8x128xf32>
    %31 = vector.broadcast %9 : vector<1x128xf32> to vector<8x128xf32>
    %32 = arith.addf %30, %31 : vector<8x128xf32>
    %c0_20 = arith.constant 0 : index
    %c0_21 = arith.constant 0 : index
    %33 = vector.load %arg11[%c0_20, %c0_21] : memref<64x128xf32, #tpu.memory_space<vmem>>, vector<8x128xf32>
    tpu.vector_store %arg11[%c0_20, %c0_21], %32 {strides = array<i32>} : memref<64x128xf32, #tpu.memory_space<vmem>>, vector<8x128xf32>,
    %c8 = arith.constant 8 : index
    %c0_22 = arith.constant 0 : index
    %34 = vector.load %arg10[%c8, %c0_22] : memref<64x128xf32, #tpu.memory_space<vmem>>, vector<8x128xf32>
    %cst_23 = arith.constant dense<0.000000e+00> : vector<8x128xf32>
    %35 = tpu.matmul %29, %7, %cst_23 {dimension_numbers = #tpu.dot_dimension_numbers<[1], [0], [0], [1], [0, 0, 1, 1], [], []>} : vector<8x32xf32>, vector<32x128xf32>, vector<8x128xf32> -> vector<8x128xf32>
    %36 = arith.addf %34, %35 : vector<8x128xf32>
    %37 = arith.negf %36 : vector<8x128xf32>
    %38 = math.exp %37 : vector<8x128xf32>
    %cst_24 = arith.constant 1.000000e+00 : f32
    %39 = vector.broadcast %cst_24 : f32 to vector<8x128xf32>
    %40 = arith.addf %39, %38 : vector<8x128xf32>
    %41 = arith.divf %39, %40 : vector<8x128xf32>
    %42 = math.tanh %36 : vector<8x128xf32>
    %43 = vector.extract_strided_slice %41 {offsets = [0, 0], sizes = [8, 32], strides = [1, 1]} : vector<8x128xf32> to vector<8x32xf32>
    %44 = vector.extract_strided_slice %41 {offsets = [0, 32], sizes = [8, 32], strides = [1, 1]} : vector<8x128xf32> to vector<8x32xf32>
    %45 = vector.extract_strided_slice %42 {offsets = [0, 64], sizes = [8, 32], strides = [1, 1]} : vector<8x128xf32> to vector<8x32xf32>
    %46 = vector.extract_strided_slice %41 {offsets = [0, 96], sizes = [8, 32], strides = [1, 1]} : vector<8x128xf32> to vector<8x32xf32>
    %47 = arith.mulf %44, %27 : vector<8x32xf32>
    %48 = arith.mulf %43, %45 : vector<8x32xf32>
    %49 = arith.addf %47, %48 : vector<8x32xf32>
    %50 = math.tanh %49 : vector<8x32xf32>
    %51 = arith.mulf %46, %50 : vector<8x32xf32>
    %cst_25 = arith.constant dense<0.000000e+00> : vector<8x128xf32>
    %52 = tpu.matmul %51, %8, %cst_25 {dimension_numbers = #tpu.dot_dimension_numbers<[1], [0], [0], [1], [0, 0, 1, 1], [], []>} : vector<8x32xf32>, vector<32x128xf32>, vector<8x128xf32> -> vector<8x128xf32>
    %53 = vector.broadcast %9 : vector<1x128xf32> to vector<8x128xf32>
    %54 = arith.addf %52, %53 : vector<8x128xf32>
    %c8_26 = arith.constant 8 : index
    %c0_27 = arith.constant 0 : index
    %55 = vector.load %arg11[%c8_26, %c0_27] : memref<64x128xf32, #tpu.memory_space<vmem>>, vector<8x128xf32>
    tpu.vector_store %arg11[%c8_26, %c0_27], %54 {strides = array<i32>} : memref<64x128xf32, #tpu.memory_space<vmem>>, vector<8x128xf32>,
    %c16 = arith.constant 16 : index
    %c0_28 = arith.constant 0 : index
    %56 = vector.load %arg10[%c16, %c0_28] : memref<64x128xf32, #tpu.memory_space<vmem>>, vector<8x128xf32>
    %cst_29 = arith.constant dense<0.000000e+00> : vector<8x128xf32>
    %57 = tpu.matmul %51, %7, %cst_29 {dimension_numbers = #tpu.dot_dimension_numbers<[1], [0], [0], [1], [0, 0, 1, 1], [], []>} : vector<8x32xf32>, vector<32x128xf32>, vector<8x128xf32> -> vector<8x128xf32>
    %58 = arith.addf %56, %57 : vector<8x128xf32>
    %59 = arith.negf %58 : vector<8x128xf32>
    %60 = math.exp %59 : vector<8x128xf32>
    %cst_30 = arith.constant 1.000000e+00 : f32
    %61 = vector.broadcast %cst_30 : f32 to vector<8x128xf32>
    %62 = arith.addf %61, %60 : vector<8x128xf32>
    %63 = arith.divf %61, %62 : vector<8x128xf32>
    %64 = math.tanh %58 : vector<8x128xf32>
    %65 = vector.extract_strided_slice %63 {offsets = [0, 0], sizes = [8, 32], strides = [1, 1]} : vector<8x128xf32> to vector<8x32xf32>
    %66 = vector.extract_strided_slice %63 {offsets = [0, 32], sizes = [8, 32], strides = [1, 1]} : vector<8x128xf32> to vector<8x32xf32>
    %67 = vector.extract_strided_slice %64 {offsets = [0, 64], sizes = [8, 32], strides = [1, 1]} : vector<8x128xf32> to vector<8x32xf32>
    %68 = vector.extract_strided_slice %63 {offsets = [0, 96], sizes = [8, 32], strides = [1, 1]} : vector<8x128xf32> to vector<8x32xf32>
    %69 = arith.mulf %66, %49 : vector<8x32xf32>
    %70 = arith.mulf %65, %67 : vector<8x32xf32>
    %71 = arith.addf %69, %70 : vector<8x32xf32>
    %72 = math.tanh %71 : vector<8x32xf32>
    %73 = arith.mulf %68, %72 : vector<8x32xf32>
    %cst_31 = arith.constant dense<0.000000e+00> : vector<8x128xf32>
    %74 = tpu.matmul %73, %8, %cst_31 {dimension_numbers = #tpu.dot_dimension_numbers<[1], [0], [0], [1], [0, 0, 1, 1], [], []>} : vector<8x32xf32>, vector<32x128xf32>, vector<8x128xf32> -> vector<8x128xf32>
    %75 = vector.broadcast %9 : vector<1x128xf32> to vector<8x128xf32>
    %76 = arith.addf %74, %75 : vector<8x128xf32>
    %c16_32 = arith.constant 16 : index
    %c0_33 = arith.constant 0 : index
    %77 = vector.load %arg11[%c16_32, %c0_33] : memref<64x128xf32, #tpu.memory_space<vmem>>, vector<8x128xf32>
    tpu.vector_store %arg11[%c16_32, %c0_33], %76 {strides = array<i32>} : memref<64x128xf32, #tpu.memory_space<vmem>>, vector<8x128xf32>,
    %c24 = arith.constant 24 : index
    %c0_34 = arith.constant 0 : index
    %78 = vector.load %arg10[%c24, %c0_34] : memref<64x128xf32, #tpu.memory_space<vmem>>, vector<8x128xf32>
    %cst_35 = arith.constant dense<0.000000e+00> : vector<8x128xf32>
    %79 = tpu.matmul %73, %7, %cst_35 {dimension_numbers = #tpu.dot_dimension_numbers<[1], [0], [0], [1], [0, 0, 1, 1], [], []>} : vector<8x32xf32>, vector<32x128xf32>, vector<8x128xf32> -> vector<8x128xf32>
    %80 = arith.addf %78, %79 : vector<8x128xf32>
    %81 = arith.negf %80 : vector<8x128xf32>
    %82 = math.exp %81 : vector<8x128xf32>
    %cst_36 = arith.constant 1.000000e+00 : f32
    %83 = vector.broadcast %cst_36 : f32 to vector<8x128xf32>
    %84 = arith.addf %83, %82 : vector<8x128xf32>
    %85 = arith.divf %83, %84 : vector<8x128xf32>
    %86 = math.tanh %80 : vector<8x128xf32>
    %87 = vector.extract_strided_slice %85 {offsets = [0, 0], sizes = [8, 32], strides = [1, 1]} : vector<8x128xf32> to vector<8x32xf32>
    %88 = vector.extract_strided_slice %85 {offsets = [0, 32], sizes = [8, 32], strides = [1, 1]} : vector<8x128xf32> to vector<8x32xf32>
    %89 = vector.extract_strided_slice %86 {offsets = [0, 64], sizes = [8, 32], strides = [1, 1]} : vector<8x128xf32> to vector<8x32xf32>
    %90 = vector.extract_strided_slice %85 {offsets = [0, 96], sizes = [8, 32], strides = [1, 1]} : vector<8x128xf32> to vector<8x32xf32>
    %91 = arith.mulf %88, %71 : vector<8x32xf32>
    %92 = arith.mulf %87, %89 : vector<8x32xf32>
    %93 = arith.addf %91, %92 : vector<8x32xf32>
    %94 = math.tanh %93 : vector<8x32xf32>
    %95 = arith.mulf %90, %94 : vector<8x32xf32>
    %cst_37 = arith.constant dense<0.000000e+00> : vector<8x128xf32>
    %96 = tpu.matmul %95, %8, %cst_37 {dimension_numbers = #tpu.dot_dimension_numbers<[1], [0], [0], [1], [0, 0, 1, 1], [], []>} : vector<8x32xf32>, vector<32x128xf32>, vector<8x128xf32> -> vector<8x128xf32>
    %97 = vector.broadcast %9 : vector<1x128xf32> to vector<8x128xf32>
    %98 = arith.addf %96, %97 : vector<8x128xf32>
    %c24_38 = arith.constant 24 : index
    %c0_39 = arith.constant 0 : index
    %99 = vector.load %arg11[%c24_38, %c0_39] : memref<64x128xf32, #tpu.memory_space<vmem>>, vector<8x128xf32>
    tpu.vector_store %arg11[%c24_38, %c0_39], %98 {strides = array<i32>} : memref<64x128xf32, #tpu.memory_space<vmem>>, vector<8x128xf32>,
    %c32 = arith.constant 32 : index
    %c0_40 = arith.constant 0 : index
    %100 = vector.load %arg10[%c32, %c0_40] : memref<64x128xf32, #tpu.memory_space<vmem>>, vector<8x128xf32>
    %cst_41 = arith.constant dense<0.000000e+00> : vector<8x128xf32>
    %101 = tpu.matmul %95, %7, %cst_41 {dimension_numbers = #tpu.dot_dimension_numbers<[1], [0], [0], [1], [0, 0, 1, 1], [], []>} : vector<8x32xf32>, vector<32x128xf32>, vector<8x128xf32> -> vector<8x128xf32>
    %102 = arith.addf %100, %101 : vector<8x128xf32>
    %103 = arith.negf %102 : vector<8x128xf32>
    %104 = math.exp %103 : vector<8x128xf32>
    %cst_42 = arith.constant 1.000000e+00 : f32
    %105 = vector.broadcast %cst_42 : f32 to vector<8x128xf32>
    %106 = arith.addf %105, %104 : vector<8x128xf32>
    %107 = arith.divf %105, %106 : vector<8x128xf32>
    %108 = math.tanh %102 : vector<8x128xf32>
    %109 = vector.extract_strided_slice %107 {offsets = [0, 0], sizes = [8, 32], strides = [1, 1]} : vector<8x128xf32> to vector<8x32xf32>
    %110 = vector.extract_strided_slice %107 {offsets = [0, 32], sizes = [8, 32], strides = [1, 1]} : vector<8x128xf32> to vector<8x32xf32>
    %111 = vector.extract_strided_slice %108 {offsets = [0, 64], sizes = [8, 32], strides = [1, 1]} : vector<8x128xf32> to vector<8x32xf32>
    %112 = vector.extract_strided_slice %107 {offsets = [0, 96], sizes = [8, 32], strides = [1, 1]} : vector<8x128xf32> to vector<8x32xf32>
    %113 = arith.mulf %110, %93 : vector<8x32xf32>
    %114 = arith.mulf %109, %111 : vector<8x32xf32>
    %115 = arith.addf %113, %114 : vector<8x32xf32>
    %116 = math.tanh %115 : vector<8x32xf32>
    %117 = arith.mulf %112, %116 : vector<8x32xf32>
    %cst_43 = arith.constant dense<0.000000e+00> : vector<8x128xf32>
    %118 = tpu.matmul %117, %8, %cst_43 {dimension_numbers = #tpu.dot_dimension_numbers<[1], [0], [0], [1], [0, 0, 1, 1], [], []>} : vector<8x32xf32>, vector<32x128xf32>, vector<8x128xf32> -> vector<8x128xf32>
    %119 = vector.broadcast %9 : vector<1x128xf32> to vector<8x128xf32>
    %120 = arith.addf %118, %119 : vector<8x128xf32>
    %c32_44 = arith.constant 32 : index
    %c0_45 = arith.constant 0 : index
    %121 = vector.load %arg11[%c32_44, %c0_45] : memref<64x128xf32, #tpu.memory_space<vmem>>, vector<8x128xf32>
    tpu.vector_store %arg11[%c32_44, %c0_45], %120 {strides = array<i32>} : memref<64x128xf32, #tpu.memory_space<vmem>>, vector<8x128xf32>,
    %c40 = arith.constant 40 : index
    %c0_46 = arith.constant 0 : index
    %122 = vector.load %arg10[%c40, %c0_46] : memref<64x128xf32, #tpu.memory_space<vmem>>, vector<8x128xf32>
    %cst_47 = arith.constant dense<0.000000e+00> : vector<8x128xf32>
    %123 = tpu.matmul %117, %7, %cst_47 {dimension_numbers = #tpu.dot_dimension_numbers<[1], [0], [0], [1], [0, 0, 1, 1], [], []>} : vector<8x32xf32>, vector<32x128xf32>, vector<8x128xf32> -> vector<8x128xf32>
    %124 = arith.addf %122, %123 : vector<8x128xf32>
    %125 = arith.negf %124 : vector<8x128xf32>
    %126 = math.exp %125 : vector<8x128xf32>
    %cst_48 = arith.constant 1.000000e+00 : f32
    %127 = vector.broadcast %cst_48 : f32 to vector<8x128xf32>
    %128 = arith.addf %127, %126 : vector<8x128xf32>
    %129 = arith.divf %127, %128 : vector<8x128xf32>
    %130 = math.tanh %124 : vector<8x128xf32>
    %131 = vector.extract_strided_slice %129 {offsets = [0, 0], sizes = [8, 32], strides = [1, 1]} : vector<8x128xf32> to vector<8x32xf32>
    %132 = vector.extract_strided_slice %129 {offsets = [0, 32], sizes = [8, 32], strides = [1, 1]} : vector<8x128xf32> to vector<8x32xf32>
    %133 = vector.extract_strided_slice %130 {offsets = [0, 64], sizes = [8, 32], strides = [1, 1]} : vector<8x128xf32> to vector<8x32xf32>
    %134 = vector.extract_strided_slice %129 {offsets = [0, 96], sizes = [8, 32], strides = [1, 1]} : vector<8x128xf32> to vector<8x32xf32>
    %135 = arith.mulf %132, %115 : vector<8x32xf32>
    %136 = arith.mulf %131, %133 : vector<8x32xf32>
    %137 = arith.addf %135, %136 : vector<8x32xf32>
    %138 = math.tanh %137 : vector<8x32xf32>
    %139 = arith.mulf %134, %138 : vector<8x32xf32>
    %cst_49 = arith.constant dense<0.000000e+00> : vector<8x128xf32>
    %140 = tpu.matmul %139, %8, %cst_49 {dimension_numbers = #tpu.dot_dimension_numbers<[1], [0], [0], [1], [0, 0, 1, 1], [], []>} : vector<8x32xf32>, vector<32x128xf32>, vector<8x128xf32> -> vector<8x128xf32>
    %141 = vector.broadcast %9 : vector<1x128xf32> to vector<8x128xf32>
    %142 = arith.addf %140, %141 : vector<8x128xf32>
    %c40_50 = arith.constant 40 : index
    %c0_51 = arith.constant 0 : index
    %143 = vector.load %arg11[%c40_50, %c0_51] : memref<64x128xf32, #tpu.memory_space<vmem>>, vector<8x128xf32>
    tpu.vector_store %arg11[%c40_50, %c0_51], %142 {strides = array<i32>} : memref<64x128xf32, #tpu.memory_space<vmem>>, vector<8x128xf32>,
    %c48 = arith.constant 48 : index
    %c0_52 = arith.constant 0 : index
    %144 = vector.load %arg10[%c48, %c0_52] : memref<64x128xf32, #tpu.memory_space<vmem>>, vector<8x128xf32>
    %cst_53 = arith.constant dense<0.000000e+00> : vector<8x128xf32>
    %145 = tpu.matmul %139, %7, %cst_53 {dimension_numbers = #tpu.dot_dimension_numbers<[1], [0], [0], [1], [0, 0, 1, 1], [], []>} : vector<8x32xf32>, vector<32x128xf32>, vector<8x128xf32> -> vector<8x128xf32>
    %146 = arith.addf %144, %145 : vector<8x128xf32>
    %147 = arith.negf %146 : vector<8x128xf32>
    %148 = math.exp %147 : vector<8x128xf32>
    %cst_54 = arith.constant 1.000000e+00 : f32
    %149 = vector.broadcast %cst_54 : f32 to vector<8x128xf32>
    %150 = arith.addf %149, %148 : vector<8x128xf32>
    %151 = arith.divf %149, %150 : vector<8x128xf32>
    %152 = math.tanh %146 : vector<8x128xf32>
    %153 = vector.extract_strided_slice %151 {offsets = [0, 0], sizes = [8, 32], strides = [1, 1]} : vector<8x128xf32> to vector<8x32xf32>
    %154 = vector.extract_strided_slice %151 {offsets = [0, 32], sizes = [8, 32], strides = [1, 1]} : vector<8x128xf32> to vector<8x32xf32>
    %155 = vector.extract_strided_slice %152 {offsets = [0, 64], sizes = [8, 32], strides = [1, 1]} : vector<8x128xf32> to vector<8x32xf32>
    %156 = vector.extract_strided_slice %151 {offsets = [0, 96], sizes = [8, 32], strides = [1, 1]} : vector<8x128xf32> to vector<8x32xf32>
    %157 = arith.mulf %154, %137 : vector<8x32xf32>
    %158 = arith.mulf %153, %155 : vector<8x32xf32>
    %159 = arith.addf %157, %158 : vector<8x32xf32>
    %160 = math.tanh %159 : vector<8x32xf32>
    %161 = arith.mulf %156, %160 : vector<8x32xf32>
    %cst_55 = arith.constant dense<0.000000e+00> : vector<8x128xf32>
    %162 = tpu.matmul %161, %8, %cst_55 {dimension_numbers = #tpu.dot_dimension_numbers<[1], [0], [0], [1], [0, 0, 1, 1], [], []>} : vector<8x32xf32>, vector<32x128xf32>, vector<8x128xf32> -> vector<8x128xf32>
    %163 = vector.broadcast %9 : vector<1x128xf32> to vector<8x128xf32>
    %164 = arith.addf %162, %163 : vector<8x128xf32>
    %c48_56 = arith.constant 48 : index
    %c0_57 = arith.constant 0 : index
    %165 = vector.load %arg11[%c48_56, %c0_57] : memref<64x128xf32, #tpu.memory_space<vmem>>, vector<8x128xf32>
    tpu.vector_store %arg11[%c48_56, %c0_57], %164 {strides = array<i32>} : memref<64x128xf32, #tpu.memory_space<vmem>>, vector<8x128xf32>,
    %c56 = arith.constant 56 : index
    %c0_58 = arith.constant 0 : index
    %166 = vector.load %arg10[%c56, %c0_58] : memref<64x128xf32, #tpu.memory_space<vmem>>, vector<8x128xf32>
    %cst_59 = arith.constant dense<0.000000e+00> : vector<8x128xf32>
    %167 = tpu.matmul %161, %7, %cst_59 {dimension_numbers = #tpu.dot_dimension_numbers<[1], [0], [0], [1], [0, 0, 1, 1], [], []>} : vector<8x32xf32>, vector<32x128xf32>, vector<8x128xf32> -> vector<8x128xf32>
    %168 = arith.addf %166, %167 : vector<8x128xf32>
    %169 = arith.negf %168 : vector<8x128xf32>
    %170 = math.exp %169 : vector<8x128xf32>
    %cst_60 = arith.constant 1.000000e+00 : f32
    %171 = vector.broadcast %cst_60 : f32 to vector<8x128xf32>
    %172 = arith.addf %171, %170 : vector<8x128xf32>
    %173 = arith.divf %171, %172 : vector<8x128xf32>
    %174 = math.tanh %168 : vector<8x128xf32>
    %175 = vector.extract_strided_slice %173 {offsets = [0, 0], sizes = [8, 32], strides = [1, 1]} : vector<8x128xf32> to vector<8x32xf32>
    %176 = vector.extract_strided_slice %173 {offsets = [0, 32], sizes = [8, 32], strides = [1, 1]} : vector<8x128xf32> to vector<8x32xf32>
    %177 = vector.extract_strided_slice %174 {offsets = [0, 64], sizes = [8, 32], strides = [1, 1]} : vector<8x128xf32> to vector<8x32xf32>
    %178 = vector.extract_strided_slice %173 {offsets = [0, 96], sizes = [8, 32], strides = [1, 1]} : vector<8x128xf32> to vector<8x32xf32>
    %179 = arith.mulf %176, %159 : vector<8x32xf32>
    %180 = arith.mulf %175, %177 : vector<8x32xf32>
    %181 = arith.addf %179, %180 : vector<8x32xf32>
    %182 = math.tanh %181 : vector<8x32xf32>
    %183 = arith.mulf %178, %182 : vector<8x32xf32>
    %cst_61 = arith.constant dense<0.000000e+00> : vector<8x128xf32>
    %184 = tpu.matmul %183, %8, %cst_61 {dimension_numbers = #tpu.dot_dimension_numbers<[1], [0], [0], [1], [0, 0, 1, 1], [], []>} : vector<8x32xf32>, vector<32x128xf32>, vector<8x128xf32> -> vector<8x128xf32>
    %185 = vector.broadcast %9 : vector<1x128xf32> to vector<8x128xf32>
    %186 = arith.addf %184, %185 : vector<8x128xf32>
    %c56_62 = arith.constant 56 : index
    %c0_63 = arith.constant 0 : index
    %187 = vector.load %arg11[%c56_62, %c0_63] : memref<64x128xf32, #tpu.memory_space<vmem>>, vector<8x128xf32>
    tpu.vector_store %arg11[%c56_62, %c0_63], %186 {strides = array<i32>} : memref<64x128xf32, #tpu.memory_space<vmem>>, vector<8x128xf32>,
    %c0_64 = arith.constant 0 : index
    %c0_65 = arith.constant 0 : index
    %188 = vector.load %arg7[%c0_64, %c0_65] : memref<32x128xf32, #tpu.memory_space<vmem>>, vector<32x128xf32>
    %cst_66 = arith.constant dense<0.000000e+00> : vector<8x128xf32>
    %189 = tpu.matmul %183, %188, %cst_66 {dimension_numbers = #tpu.dot_dimension_numbers<[1], [0], [0], [1], [0, 0, 1, 1], [], []>} : vector<8x32xf32>, vector<32x128xf32>, vector<8x128xf32> -> vector<8x128xf32>
    %c0_67 = arith.constant 0 : index
    %c0_68 = arith.constant 0 : index
    %190 = vector.load %arg8[%c0_67, %c0_68] : memref<1x128xf32, #tpu.memory_space<vmem>>, vector<1x128xf32>
    %191 = vector.broadcast %190 : vector<1x128xf32> to vector<8x128xf32>
    %192 = arith.addf %189, %191 : vector<8x128xf32>
    %c0_69 = arith.constant 0 : index
    %c0_70 = arith.constant 0 : index
    %c0_71 = arith.constant 0 : index
    %193 = vector.load %arg9[%c0_69, %c0_70, %c0_71] : memref<2x8x128xf32, #tpu.memory_space<vmem>>, vector<1x8x128xf32>
    %194 = vector.shape_cast %193 : vector<1x8x128xf32> to vector<8x128xf32>
    %195 = vector.shape_cast %192 : vector<8x128xf32> to vector<1x8x128xf32>
    tpu.vector_store %arg9[%c0_69, %c0_70, %c0_71], %195 {strides = array<i32>} : memref<2x8x128xf32, #tpu.memory_space<vmem>>, vector<1x8x128xf32>,
    %c0_72 = arith.constant 0 : index
    %c0_73 = arith.constant 0 : index
    %196 = vector.load %arg5[%c0_72, %c0_73] : memref<32x128xf32, #tpu.memory_space<vmem>>, vector<32x128xf32>
    %cst_74 = arith.constant 0.000000e+00 : f32
    %197 = vector.broadcast %cst_74 : f32 to vector<8x32xf32>
    %cst_75 = arith.constant 0.000000e+00 : f32
    %198 = vector.broadcast %cst_75 : f32 to vector<8x32xf32>
    %c0_76 = arith.constant 0 : index
    %c0_77 = arith.constant 0 : index
    %199 = vector.load %arg11[%c0_76, %c0_77] : memref<64x128xf32, #tpu.memory_space<vmem>>, vector<8x128xf32>
    %cst_78 = arith.constant dense<0.000000e+00> : vector<8x128xf32>
    %200 = tpu.matmul %197, %196, %cst_78 {dimension_numbers = #tpu.dot_dimension_numbers<[1], [0], [0], [1], [0, 0, 1, 1], [], []>} : vector<8x32xf32>, vector<32x128xf32>, vector<8x128xf32> -> vector<8x128xf32>
    %201 = arith.addf %199, %200 : vector<8x128xf32>
    %202 = arith.negf %201 : vector<8x128xf32>
    %203 = math.exp %202 : vector<8x128xf32>
    %cst_79 = arith.constant 1.000000e+00 : f32
    %204 = vector.broadcast %cst_79 : f32 to vector<8x128xf32>
    %205 = arith.addf %204, %203 : vector<8x128xf32>
    %206 = arith.divf %204, %205 : vector<8x128xf32>
    %207 = math.tanh %201 : vector<8x128xf32>
    %208 = vector.extract_strided_slice %206 {offsets = [0, 0], sizes = [8, 32], strides = [1, 1]} : vector<8x128xf32> to vector<8x32xf32>
    %209 = vector.extract_strided_slice %206 {offsets = [0, 32], sizes = [8, 32], strides = [1, 1]} : vector<8x128xf32> to vector<8x32xf32>
    %210 = vector.extract_strided_slice %207 {offsets = [0, 64], sizes = [8, 32], strides = [1, 1]} : vector<8x128xf32> to vector<8x32xf32>
    %211 = vector.extract_strided_slice %206 {offsets = [0, 96], sizes = [8, 32], strides = [1, 1]} : vector<8x128xf32> to vector<8x32xf32>
    %212 = arith.mulf %209, %198 : vector<8x32xf32>
    %213 = arith.mulf %208, %210 : vector<8x32xf32>
    %214 = arith.addf %212, %213 : vector<8x32xf32>
    %215 = math.tanh %214 : vector<8x32xf32>
    %216 = arith.mulf %211, %215 : vector<8x32xf32>
    %c8_80 = arith.constant 8 : index
    %c0_81 = arith.constant 0 : index
    %217 = vector.load %arg11[%c8_80, %c0_81] : memref<64x128xf32, #tpu.memory_space<vmem>>, vector<8x128xf32>
    %cst_82 = arith.constant dense<0.000000e+00> : vector<8x128xf32>
    %218 = tpu.matmul %216, %196, %cst_82 {dimension_numbers = #tpu.dot_dimension_numbers<[1], [0], [0], [1], [0, 0, 1, 1], [], []>} : vector<8x32xf32>, vector<32x128xf32>, vector<8x128xf32> -> vector<8x128xf32>
    %219 = arith.addf %217, %218 : vector<8x128xf32>
    %220 = arith.negf %219 : vector<8x128xf32>
    %221 = math.exp %220 : vector<8x128xf32>
    %cst_83 = arith.constant 1.000000e+00 : f32
    %222 = vector.broadcast %cst_83 : f32 to vector<8x128xf32>
    %223 = arith.addf %222, %221 : vector<8x128xf32>
    %224 = arith.divf %222, %223 : vector<8x128xf32>
    %225 = math.tanh %219 : vector<8x128xf32>
    %226 = vector.extract_strided_slice %224 {offsets = [0, 0], sizes = [8, 32], strides = [1, 1]} : vector<8x128xf32> to vector<8x32xf32>
    %227 = vector.extract_strided_slice %224 {offsets = [0, 32], sizes = [8, 32], strides = [1, 1]} : vector<8x128xf32> to vector<8x32xf32>
    %228 = vector.extract_strided_slice %225 {offsets = [0, 64], sizes = [8, 32], strides = [1, 1]} : vector<8x128xf32> to vector<8x32xf32>
    %229 = vector.extract_strided_slice %224 {offsets = [0, 96], sizes = [8, 32], strides = [1, 1]} : vector<8x128xf32> to vector<8x32xf32>
    %230 = arith.mulf %227, %214 : vector<8x32xf32>
    %231 = arith.mulf %226, %228 : vector<8x32xf32>
    %232 = arith.addf %230, %231 : vector<8x32xf32>
    %233 = math.tanh %232 : vector<8x32xf32>
    %234 = arith.mulf %229, %233 : vector<8x32xf32>
    %c16_84 = arith.constant 16 : index
    %c0_85 = arith.constant 0 : index
    %235 = vector.load %arg11[%c16_84, %c0_85] : memref<64x128xf32, #tpu.memory_space<vmem>>, vector<8x128xf32>
    %cst_86 = arith.constant dense<0.000000e+00> : vector<8x128xf32>
    %236 = tpu.matmul %234, %196, %cst_86 {dimension_numbers = #tpu.dot_dimension_numbers<[1], [0], [0], [1], [0, 0, 1, 1], [], []>} : vector<8x32xf32>, vector<32x128xf32>, vector<8x128xf32> -> vector<8x128xf32>
    %237 = arith.addf %235, %236 : vector<8x128xf32>
    %238 = arith.negf %237 : vector<8x128xf32>
    %239 = math.exp %238 : vector<8x128xf32>
    %cst_87 = arith.constant 1.000000e+00 : f32
    %240 = vector.broadcast %cst_87 : f32 to vector<8x128xf32>
    %241 = arith.addf %240, %239 : vector<8x128xf32>
    %242 = arith.divf %240, %241 : vector<8x128xf32>
    %243 = math.tanh %237 : vector<8x128xf32>
    %244 = vector.extract_strided_slice %242 {offsets = [0, 0], sizes = [8, 32], strides = [1, 1]} : vector<8x128xf32> to vector<8x32xf32>
    %245 = vector.extract_strided_slice %242 {offsets = [0, 32], sizes = [8, 32], strides = [1, 1]} : vector<8x128xf32> to vector<8x32xf32>
    %246 = vector.extract_strided_slice %243 {offsets = [0, 64], sizes = [8, 32], strides = [1, 1]} : vector<8x128xf32> to vector<8x32xf32>
    %247 = vector.extract_strided_slice %242 {offsets = [0, 96], sizes = [8, 32], strides = [1, 1]} : vector<8x128xf32> to vector<8x32xf32>
    %248 = arith.mulf %245, %232 : vector<8x32xf32>
    %249 = arith.mulf %244, %246 : vector<8x32xf32>
    %250 = arith.addf %248, %249 : vector<8x32xf32>
    %251 = math.tanh %250 : vector<8x32xf32>
    %252 = arith.mulf %247, %251 : vector<8x32xf32>
    %c24_88 = arith.constant 24 : index
    %c0_89 = arith.constant 0 : index
    %253 = vector.load %arg11[%c24_88, %c0_89] : memref<64x128xf32, #tpu.memory_space<vmem>>, vector<8x128xf32>
    %cst_90 = arith.constant dense<0.000000e+00> : vector<8x128xf32>
    %254 = tpu.matmul %252, %196, %cst_90 {dimension_numbers = #tpu.dot_dimension_numbers<[1], [0], [0], [1], [0, 0, 1, 1], [], []>} : vector<8x32xf32>, vector<32x128xf32>, vector<8x128xf32> -> vector<8x128xf32>
    %255 = arith.addf %253, %254 : vector<8x128xf32>
    %256 = arith.negf %255 : vector<8x128xf32>
    %257 = math.exp %256 : vector<8x128xf32>
    %cst_91 = arith.constant 1.000000e+00 : f32
    %258 = vector.broadcast %cst_91 : f32 to vector<8x128xf32>
    %259 = arith.addf %258, %257 : vector<8x128xf32>
    %260 = arith.divf %258, %259 : vector<8x128xf32>
    %261 = math.tanh %255 : vector<8x128xf32>
    %262 = vector.extract_strided_slice %260 {offsets = [0, 0], sizes = [8, 32], strides = [1, 1]} : vector<8x128xf32> to vector<8x32xf32>
    %263 = vector.extract_strided_slice %260 {offsets = [0, 32], sizes = [8, 32], strides = [1, 1]} : vector<8x128xf32> to vector<8x32xf32>
    %264 = vector.extract_strided_slice %261 {offsets = [0, 64], sizes = [8, 32], strides = [1, 1]} : vector<8x128xf32> to vector<8x32xf32>
    %265 = vector.extract_strided_slice %260 {offsets = [0, 96], sizes = [8, 32], strides = [1, 1]} : vector<8x128xf32> to vector<8x32xf32>
    %266 = arith.mulf %263, %250 : vector<8x32xf32>
    %267 = arith.mulf %262, %264 : vector<8x32xf32>
    %268 = arith.addf %266, %267 : vector<8x32xf32>
    %269 = math.tanh %268 : vector<8x32xf32>
    %270 = arith.mulf %265, %269 : vector<8x32xf32>
    %c32_92 = arith.constant 32 : index
    %c0_93 = arith.constant 0 : index
    %271 = vector.load %arg11[%c32_92, %c0_93] : memref<64x128xf32, #tpu.memory_space<vmem>>, vector<8x128xf32>
    %cst_94 = arith.constant dense<0.000000e+00> : vector<8x128xf32>
    %272 = tpu.matmul %270, %196, %cst_94 {dimension_numbers = #tpu.dot_dimension_numbers<[1], [0], [0], [1], [0, 0, 1, 1], [], []>} : vector<8x32xf32>, vector<32x128xf32>, vector<8x128xf32> -> vector<8x128xf32>
    %273 = arith.addf %271, %272 : vector<8x128xf32>
    %274 = arith.negf %273 : vector<8x128xf32>
    %275 = math.exp %274 : vector<8x128xf32>
    %cst_95 = arith.constant 1.000000e+00 : f32
    %276 = vector.broadcast %cst_95 : f32 to vector<8x128xf32>
    %277 = arith.addf %276, %275 : vector<8x128xf32>
    %278 = arith.divf %276, %277 : vector<8x128xf32>
    %279 = math.tanh %273 : vector<8x128xf32>
    %280 = vector.extract_strided_slice %278 {offsets = [0, 0], sizes = [8, 32], strides = [1, 1]} : vector<8x128xf32> to vector<8x32xf32>
    %281 = vector.extract_strided_slice %278 {offsets = [0, 32], sizes = [8, 32], strides = [1, 1]} : vector<8x128xf32> to vector<8x32xf32>
    %282 = vector.extract_strided_slice %279 {offsets = [0, 64], sizes = [8, 32], strides = [1, 1]} : vector<8x128xf32> to vector<8x32xf32>
    %283 = vector.extract_strided_slice %278 {offsets = [0, 96], sizes = [8, 32], strides = [1, 1]} : vector<8x128xf32> to vector<8x32xf32>
    %284 = arith.mulf %281, %268 : vector<8x32xf32>
    %285 = arith.mulf %280, %282 : vector<8x32xf32>
    %286 = arith.addf %284, %285 : vector<8x32xf32>
    %287 = math.tanh %286 : vector<8x32xf32>
    %288 = arith.mulf %283, %287 : vector<8x32xf32>
    %c40_96 = arith.constant 40 : index
    %c0_97 = arith.constant 0 : index
    %289 = vector.load %arg11[%c40_96, %c0_97] : memref<64x128xf32, #tpu.memory_space<vmem>>, vector<8x128xf32>
    %cst_98 = arith.constant dense<0.000000e+00> : vector<8x128xf32>
    %290 = tpu.matmul %288, %196, %cst_98 {dimension_numbers = #tpu.dot_dimension_numbers<[1], [0], [0], [1], [0, 0, 1, 1], [], []>} : vector<8x32xf32>, vector<32x128xf32>, vector<8x128xf32> -> vector<8x128xf32>
    %291 = arith.addf %289, %290 : vector<8x128xf32>
    %292 = arith.negf %291 : vector<8x128xf32>
    %293 = math.exp %292 : vector<8x128xf32>
    %cst_99 = arith.constant 1.000000e+00 : f32
    %294 = vector.broadcast %cst_99 : f32 to vector<8x128xf32>
    %295 = arith.addf %294, %293 : vector<8x128xf32>
    %296 = arith.divf %294, %295 : vector<8x128xf32>
    %297 = math.tanh %291 : vector<8x128xf32>
    %298 = vector.extract_strided_slice %296 {offsets = [0, 0], sizes = [8, 32], strides = [1, 1]} : vector<8x128xf32> to vector<8x32xf32>
    %299 = vector.extract_strided_slice %296 {offsets = [0, 32], sizes = [8, 32], strides = [1, 1]} : vector<8x128xf32> to vector<8x32xf32>
    %300 = vector.extract_strided_slice %297 {offsets = [0, 64], sizes = [8, 32], strides = [1, 1]} : vector<8x128xf32> to vector<8x32xf32>
    %301 = vector.extract_strided_slice %296 {offsets = [0, 96], sizes = [8, 32], strides = [1, 1]} : vector<8x128xf32> to vector<8x32xf32>
    %302 = arith.mulf %299, %286 : vector<8x32xf32>
    %303 = arith.mulf %298, %300 : vector<8x32xf32>
    %304 = arith.addf %302, %303 : vector<8x32xf32>
    %305 = math.tanh %304 : vector<8x32xf32>
    %306 = arith.mulf %301, %305 : vector<8x32xf32>
    %c48_100 = arith.constant 48 : index
    %c0_101 = arith.constant 0 : index
    %307 = vector.load %arg11[%c48_100, %c0_101] : memref<64x128xf32, #tpu.memory_space<vmem>>, vector<8x128xf32>
    %cst_102 = arith.constant dense<0.000000e+00> : vector<8x128xf32>
    %308 = tpu.matmul %306, %196, %cst_102 {dimension_numbers = #tpu.dot_dimension_numbers<[1], [0], [0], [1], [0, 0, 1, 1], [], []>} : vector<8x32xf32>, vector<32x128xf32>, vector<8x128xf32> -> vector<8x128xf32>
    %309 = arith.addf %307, %308 : vector<8x128xf32>
    %310 = arith.negf %309 : vector<8x128xf32>
    %311 = math.exp %310 : vector<8x128xf32>
    %cst_103 = arith.constant 1.000000e+00 : f32
    %312 = vector.broadcast %cst_103 : f32 to vector<8x128xf32>
    %313 = arith.addf %312, %311 : vector<8x128xf32>
    %314 = arith.divf %312, %313 : vector<8x128xf32>
    %315 = math.tanh %309 : vector<8x128xf32>
    %316 = vector.extract_strided_slice %314 {offsets = [0, 0], sizes = [8, 32], strides = [1, 1]} : vector<8x128xf32> to vector<8x32xf32>
    %317 = vector.extract_strided_slice %314 {offsets = [0, 32], sizes = [8, 32], strides = [1, 1]} : vector<8x128xf32> to vector<8x32xf32>
    %318 = vector.extract_strided_slice %315 {offsets = [0, 64], sizes = [8, 32], strides = [1, 1]} : vector<8x128xf32> to vector<8x32xf32>
    %319 = vector.extract_strided_slice %314 {offsets = [0, 96], sizes = [8, 32], strides = [1, 1]} : vector<8x128xf32> to vector<8x32xf32>
    %320 = arith.mulf %317, %304 : vector<8x32xf32>
    %321 = arith.mulf %316, %318 : vector<8x32xf32>
    %322 = arith.addf %320, %321 : vector<8x32xf32>
    %323 = math.tanh %322 : vector<8x32xf32>
    %324 = arith.mulf %319, %323 : vector<8x32xf32>
    %c56_104 = arith.constant 56 : index
    %c0_105 = arith.constant 0 : index
    %325 = vector.load %arg11[%c56_104, %c0_105] : memref<64x128xf32, #tpu.memory_space<vmem>>, vector<8x128xf32>
    %cst_106 = arith.constant dense<0.000000e+00> : vector<8x128xf32>
    %326 = tpu.matmul %324, %196, %cst_106 {dimension_numbers = #tpu.dot_dimension_numbers<[1], [0], [0], [1], [0, 0, 1, 1], [], []>} : vector<8x32xf32>, vector<32x128xf32>, vector<8x128xf32> -> vector<8x128xf32>
    %327 = arith.addf %325, %326 : vector<8x128xf32>
    %328 = arith.negf %327 : vector<8x128xf32>
    %329 = math.exp %328 : vector<8x128xf32>
    %cst_107 = arith.constant 1.000000e+00 : f32
    %330 = vector.broadcast %cst_107 : f32 to vector<8x128xf32>
    %331 = arith.addf %330, %329 : vector<8x128xf32>
    %332 = arith.divf %330, %331 : vector<8x128xf32>
    %333 = math.tanh %327 : vector<8x128xf32>
    %334 = vector.extract_strided_slice %332 {offsets = [0, 0], sizes = [8, 32], strides = [1, 1]} : vector<8x128xf32> to vector<8x32xf32>
    %335 = vector.extract_strided_slice %332 {offsets = [0, 32], sizes = [8, 32], strides = [1, 1]} : vector<8x128xf32> to vector<8x32xf32>
    %336 = vector.extract_strided_slice %333 {offsets = [0, 64], sizes = [8, 32], strides = [1, 1]} : vector<8x128xf32> to vector<8x32xf32>
    %337 = vector.extract_strided_slice %332 {offsets = [0, 96], sizes = [8, 32], strides = [1, 1]} : vector<8x128xf32> to vector<8x32xf32>
    %338 = arith.mulf %335, %322 : vector<8x32xf32>
    %339 = arith.mulf %334, %336 : vector<8x32xf32>
    %340 = arith.addf %338, %339 : vector<8x32xf32>
    %341 = math.tanh %340 : vector<8x32xf32>
    %342 = arith.mulf %337, %341 : vector<8x32xf32>
    %c0_108 = arith.constant 0 : index
    %c0_109 = arith.constant 0 : index
    %343 = vector.load %arg7[%c0_108, %c0_109] : memref<32x128xf32, #tpu.memory_space<vmem>>, vector<32x128xf32>
    %cst_110 = arith.constant dense<0.000000e+00> : vector<8x128xf32>
    %344 = tpu.matmul %342, %343, %cst_110 {dimension_numbers = #tpu.dot_dimension_numbers<[1], [0], [0], [1], [0, 0, 1, 1], [], []>} : vector<8x32xf32>, vector<32x128xf32>, vector<8x128xf32> -> vector<8x128xf32>
    %c0_111 = arith.constant 0 : index
    %c0_112 = arith.constant 0 : index
    %345 = vector.load %arg8[%c0_111, %c0_112] : memref<1x128xf32, #tpu.memory_space<vmem>>, vector<1x128xf32>
    %346 = vector.broadcast %345 : vector<1x128xf32> to vector<8x128xf32>
    %347 = arith.addf %344, %346 : vector<8x128xf32>
    %c1 = arith.constant 1 : index
    %c0_113 = arith.constant 0 : index
    %c0_114 = arith.constant 0 : index
    %348 = vector.load %arg9[%c1, %c0_113, %c0_114] : memref<2x8x128xf32, #tpu.memory_space<vmem>>, vector<1x8x128xf32>
    %349 = vector.shape_cast %348 : vector<1x8x128xf32> to vector<8x128xf32>
    %350 = vector.shape_cast %347 : vector<8x128xf32> to vector<1x8x128xf32>
    tpu.vector_store %arg9[%c1, %c0_113, %c0_114], %350 {strides = array<i32>} : memref<2x8x128xf32, #tpu.memory_space<vmem>>, vector<1x8x128xf32>,
    return
  }
}

</mosaic_0001>

<llo_original>
// kernel: lstm_model_forward.1
$region0: #{lstm_model_forward.1}
  #allocation0 [shape = 'u32[]', space=smem, size = 0x4, offset = 0x4, fixed_abs, tag = 'smem constant byte address 0x4 - core index']
  #allocation1 [shape = 'u32[72,128]{1,0:T(1,128)}', space=vmem, size = 0x9000, scoped, tag = 'internal scratch']
  #allocation2 [shape = 'f32[64,128]{1,0:T(8,128)}', space=vmem, size = 0x8000, scoped, tag = 'scratch operand']
  #allocation3 [shape = 'f32[64,128]{1,0:T(8,128)}', space=vmem, size = 0x8000, scoped, tag = 'scratch operand']
  %s0 = inlined_call_operand.vmem [shape: f32[64,8], index: 0, kind: input, shape index: {}]
  %s1 = inlined_call_operand.vmem [shape: f32[8,128], index: 1, kind: input, shape index: {}]
  %s2 = inlined_call_operand.vmem [shape: f32[32,128], index: 2, kind: input, shape index: {}]
  %s3 = inlined_call_operand.vmem [shape: f32[1,128], index: 3, kind: input, shape index: {}]
  %s4 = inlined_call_operand.vmem [shape: f32[32,128], index: 4, kind: input, shape index: {}]
  %s5 = inlined_call_operand.vmem [shape: f32[32,128], index: 5, kind: input, shape index: {}]
  %s6 = inlined_call_operand.vmem [shape: f32[1,128], index: 6, kind: input, shape index: {}]
  %s7 = inlined_call_operand.vmem [shape: f32[32,128], index: 7, kind: input, shape index: {}]
  %s8 = inlined_call_operand.vmem [shape: f32[1,128], index: 8, kind: input, shape index: {}]
  %s9 = inlined_call_operand.vmem [shape: f32[2,8,128], index: 9, kind: output, shape index: {}]
  %s10 = sld [smem:[#allocation0]]
  $region46: #{lstm_model_forward.1} parent=0
    _
  %s12 = ssub.s32 1, %s10
  %s13 = scalar_select 0, %s12, %s10
  // Predicated region
  $region2: #{lstm_model_forward.1} parent=0 // pred_check
    _
  $region3: #{lstm_model_forward.1} parent=0 // pred_check_branch
    %15 = sbr.rel (0) target = $region5
  $region4: #{lstm_model_forward.1} parent=0 // pred_region
    _
  $region5: #{lstm_model_forward.1} parent=0 // pred_fallthru
    _
  // Predicated region
  $region6: #{lstm_model_forward.1} parent=0 // pred_check
    _
  $region7: #{lstm_model_forward.1} parent=0 // pred_check_branch
    %17 = sbr.rel (0) target = $region9
  $region8: #{lstm_model_forward.1} parent=0 // pred_region
    _
  $region9: #{lstm_model_forward.1} parent=0 // pred_fallthru
    _
  // Predicated region
  $region10: #{lstm_model_forward.1} parent=0 // pred_check
    _
  $region11: #{lstm_model_forward.1} parent=0 // pred_check_branch
    %19 = sbr.rel (0) target = $region13
  $region12: #{lstm_model_forward.1} parent=0 // pred_region
    _
  $region13: #{lstm_model_forward.1} parent=0 // pred_fallthru
    _
  // Predicated region
  $region14: #{lstm_model_forward.1} parent=0 // pred_check
    _
  $region15: #{lstm_model_forward.1} parent=0 // pred_check_branch
    %21 = sbr.rel (0) target = $region17
  $region16: #{lstm_model_forward.1} parent=0 // pred_region
    _
  $region17: #{lstm_model_forward.1} parent=0 // pred_fallthru
    _
  // Predicated region
  $region18: #{lstm_model_forward.1} parent=0 // pred_check
    _
  $region19: #{lstm_model_forward.1} parent=0 // pred_check_branch
    %23 = sbr.rel (0) target = $region21
  $region20: #{lstm_model_forward.1} parent=0 // pred_region
    _
  $region21: #{lstm_model_forward.1} parent=0 // pred_fallthru
    _
  // Predicated region
  $region22: #{lstm_model_forward.1} parent=0 // pred_check
    _
  $region23: #{lstm_model_forward.1} parent=0 // pred_check_branch
    %25 = sbr.rel (0) target = $region25
  $region24: #{lstm_model_forward.1} parent=0 // pred_region
    _
  $region25: #{lstm_model_forward.1} parent=0 // pred_fallthru
    _
  // Predicated region
  $region26: #{lstm_model_forward.1} parent=0 // pred_check
    _
  $region27: #{lstm_model_forward.1} parent=0 // pred_check_branch
    %27 = sbr.rel (0) target = $region29
  $region28: #{lstm_model_forward.1} parent=0 // pred_region
    _
  $region29: #{lstm_model_forward.1} parent=0 // pred_fallthru
    _
  // Predicated region
  $region30: #{lstm_model_forward.1} parent=0 // pred_check
    _
  $region31: #{lstm_model_forward.1} parent=0 // pred_check_branch
    %29 = sbr.rel (0) target = $region33
  $region32: #{lstm_model_forward.1} parent=0 // pred_region
    _
  $region33: #{lstm_model_forward.1} parent=0 // pred_fallthru
    _
  // Predicated region
  $region34: #{lstm_model_forward.1} parent=0 // pred_check
    _
  $region35: #{lstm_model_forward.1} parent=0 // pred_check_branch
    %31 = sbr.rel (0) target = $region37
  $region36: #{lstm_model_forward.1} parent=0 // pred_region
    _
  $region37: #{lstm_model_forward.1} parent=0 // pred_fallthru
    _
  %v32 = vld [vmem:[%s1] sm:$0xff]
  %v33 = vld [vmem:[%s3] sm:$0x1]
  %v34 = vld [vmem:[%s0] sm:$0xff]
  %v35 = vld [vmem:[%s0 + $0x8] sm:$0xff]
  %v36 = vld [vmem:[%s0 + $0x10] sm:$0xff]
  %v37 = vld [vmem:[%s0 + $0x18] sm:$0xff]
  %v38 = vld [vmem:[%s0 + $0x20] sm:$0xff]
  %v39 = vld [vmem:[%s0 + $0x28] sm:$0xff]
  %v40 = vld [vmem:[%s0 + $0x30] sm:$0xff]
  %v41 = vld [vmem:[%s0 + $0x38] sm:$0xff]
  %v43 = vperm.slane %v33, 0
  %vm45 = vcmask 64512
  %v47 = vsel %vm45, %v34, 0
  %v50 = vsel %vm45, %v35, 0
  %v53 = vsel %vm45, %v36, 0
  %v56 = vsel %vm45, %v37, 0
  %v59 = vsel %vm45, %v38, 0
  %v62 = vsel %vm45, %v39, 0
  %v65 = vsel %vm45, %v40, 0
  %v68 = vsel %vm45, %v41, 0
  %70 = vmatpush.msra.mxu0 0.0
  %71 = vmatpush.msra.mxu0 0.0
  %72 = vmatpush.msra.mxu0 0.0
  %73 = vmatpush.msra.mxu0 0.0
  %74 = vmatpush.msra.mxu0 0.0
  %75 = vmatpush.msra.mxu0 0.0
  %76 = vmatpush.msra.mxu0 0.0
  %77 = vmatpush.msra.mxu0 0.0
  %78 = vmatpush.msra.mxu0 0.0
  %79 = vmatpush.msra.mxu0 0.0
  %80 = vmatpush.msra.mxu0 0.0
  %81 = vmatpush.msra.mxu0 0.0
  %82 = vmatpush.msra.mxu0 0.0
  %83 = vmatpush.msra.mxu0 0.0
  %84 = vmatpush.msra.mxu0 0.0
  %85 = vmatpush.msra.mxu0 %v32
  %86 = vmatmul.f32.gmra.mxu0 %v47
  %v87 = vpop.f32.mrf.mxu0
  %v88 = vadd.f32 %v43, %v87
  %89 = vmatmul.f32.gmra.mxu0 %v50
  %v90 = vpop.f32.mrf.mxu0
  %v91 = vadd.f32 %v43, %v90
  %92 = vmatmul.f32.gmra.mxu0 %v53
  %v93 = vpop.f32.mrf.mxu0
  %v94 = vadd.f32 %v43, %v93
  %95 = vmatmul.f32.gmra.mxu0 %v56
  %v96 = vpop.f32.mrf.mxu0
  %v97 = vadd.f32 %v43, %v96
  %98 = vmatmul.f32.gmra.mxu0 %v59
  %v99 = vpop.f32.mrf.mxu0
  %v100 = vadd.f32 %v43, %v99
  %101 = vmatmul.f32.gmra.mxu0 %v62
  %v102 = vpop.f32.mrf.mxu0
  %v103 = vadd.f32 %v43, %v102
  %104 = vmatmul.f32.gmra.mxu0 %v65
  %v105 = vpop.f32.mrf.mxu0
  %v106 = vadd.f32 %v43, %v105
  %107 = vmatmul.f32.gmra.mxu0 %v68
  %v108 = vpop.f32.mrf.mxu0
  %v109 = vadd.f32 %v43, %v108
  %110 = vdwg.mxu0
  %111 = vst [vmem:[#allocation2] sm:$0xff] %v88
  %112 = vst [vmem:[#allocation2 + $0x8] sm:$0xff] %v91
  %113 = vst [vmem:[#allocation2 + $0x10] sm:$0xff] %v94
  %114 = vst [vmem:[#allocation2 + $0x18] sm:$0xff] %v97
  %115 = vst [vmem:[#allocation2 + $0x20] sm:$0xff] %v100
  %116 = vst [vmem:[#allocation2 + $0x28] sm:$0xff] %v103
  %117 = vst [vmem:[#allocation2 + $0x30] sm:$0xff] %v106
  %118 = vst [vmem:[#allocation2 + $0x38] sm:$0xff] %v109
  %v119 = vld [vmem:[%s2] sm:$0xff]
  %v120 = vld [vmem:[%s2 + $0x8] sm:$0xff]
  %v121 = vld [vmem:[%s2 + $0x10] sm:$0xff]
  %v122 = vld [vmem:[%s2 + $0x18] sm:$0xff]
  %v123 = vld [vmem:[%s4] sm:$0xff]
  %v124 = vld [vmem:[%s4 + $0x8] sm:$0xff]
  %v125 = vld [vmem:[%s4 + $0x10] sm:$0xff]
  %v126 = vld [vmem:[%s4 + $0x18] sm:$0xff]
  %v127 = vld [vmem:[%s6] sm:$0x1]
  %v128 = vld [vmem:[#allocation2] sm:$0xff]
  %vm129 = vcmask 261120
  %v131 = vsel %vm129, 0.0, 0
  %133 = vmatpush.msra.mxu0 0.0
  %134 = vmatpush.msra.mxu0 0.0
  %135 = vmatpush.msra.mxu0 0.0
  %136 = vmatpush.msra.mxu0 0.0
  %137 = vmatpush.msra.mxu0 0.0
  %138 = vmatpush.msra.mxu0 0.0
  %139 = vmatpush.msra.mxu0 0.0
  %140 = vmatpush.msra.mxu0 0.0
  %141 = vmatpush.msra.mxu0 0.0
  %142 = vmatpush.msra.mxu0 0.0
  %143 = vmatpush.msra.mxu0 0.0
  %144 = vmatpush.msra.mxu0 0.0
  %145 = vmatpush.msra.mxu0 %v122
  %146 = vmatpush.msra.mxu0 %v121
  %147 = vmatpush.msra.mxu0 %v120
  %148 = vmatpush.msra.mxu0 %v119
  %149 = vmatmul.f32.gmra.mxu0 %v131
  %v150 = vpop.f32.mrf.mxu0
  %v151 = vadd.f32 0.0, %v150
  %152 = vdwg.mxu0
  %v153 = vadd.f32 %v128, %v151
  %v154 = vxor.u32 %v153, 2147483648
  %v155 = vmul.f32 %v154, 1.442695
  %v156 = vpow.pop %v155
  %v157 = vadd.f32 %v156, 1.0
  %v158 = vrcp.pop %v157
  %v159 = vmul.f32 %v157, %v158
  %v160 = vsub.f32 1.0, %v159
  %v161 = vmul.f32 %v158, %v160
  %v162 = vadd.f32 %v158, %v161
  %vm163 = vweird.f32 %v157
  %vm164 = vweird.f32 %v158
  %vm165 = vmor %vm163, %vm164
  %v166 = vsel %vm165, %v158, %v162
  %v167 = vand.u32 2147483647, %v157
  %vm168 = vcmp.eq.f32.partialorder %v167, 8.507059e+37
  %v169 = vand.u32 %v157, 2147483648
  %v170 = vor.u32 1.1754944e-38, %v169
  %v171 = vsel %vm168, %v170, %v166
  %v172 = vmul.f32 1.0, %v171
  %v173 = vtanh.pop %v153
  %v174 = vmul.f32 %v172, 0.0
  %176 = vrot.lane.b32.xlu0 %v173, 64
  %v177 = vpop.permute.xlu0 %176
  %v179 = vmul.f32 %v172, %v177
  %181 = vrot.lane.b32.xlu0 %v179, 32
  %v182 = vpop.permute.xlu0 %181
  %v184 = vadd.f32 %v174, %v182
  %v185 = vtanh.pop %v184
  %187 = vrot.lane.b32.xlu0 %v185, 64
  %v188 = vpop.permute.xlu0 %187
  %v190 = vmul.f32 %v172, %v188
  %v192 = vperm.slane %v127, 0
  %195 = vrot.lane.b32.xlu0 %v190, 32
  %v196 = vpop.permute.xlu0 %195
  %v197 = vsel %vm129, %v196, 0
  %199 = vmatpush.msra.mxu0 0.0
  %200 = vmatpush.msra.mxu0 0.0
  %201 = vmatpush.msra.mxu0 0.0
  %202 = vmatpush.msra.mxu0 0.0
  %203 = vmatpush.msra.mxu0 0.0
  %204 = vmatpush.msra.mxu0 0.0
  %205 = vmatpush.msra.mxu0 0.0
  %206 = vmatpush.msra.mxu0 0.0
  %207 = vmatpush.msra.mxu0 0.0
  %208 = vmatpush.msra.mxu0 0.0
  %209 = vmatpush.msra.mxu0 0.0
  %210 = vmatpush.msra.mxu0 0.0
  %211 = vmatpush.msra.mxu0 %v126
  %212 = vmatpush.msra.mxu0 %v125
  %213 = vmatpush.msra.mxu0 %v124
  %214 = vmatpush.msra.mxu0 %v123
  %215 = vmatmul.f32.gmra.mxu0 %v197
  %v216 = vpop.f32.mrf.mxu0
  %v217 = vadd.f32 %v192, %v216
  %218 = vdwg.mxu0
  %219 = vst [vmem:[#allocation3] sm:$0xff] %v217
  %v220 = vld [vmem:[#allocation2 + $0x8] sm:$0xff]
  %221 = vmatpush.msra.mxu0 0.0
  %222 = vmatpush.msra.mxu0 0.0
  %223 = vmatpush.msra.mxu0 0.0
  %224 = vmatpush.msra.mxu0 0.0
  %225 = vmatpush.msra.mxu0 0.0
  %226 = vmatpush.msra.mxu0 0.0
  %227 = vmatpush.msra.mxu0 0.0
  %228 = vmatpush.msra.mxu0 0.0
  %229 = vmatpush.msra.mxu0 0.0
  %230 = vmatpush.msra.mxu0 0.0
  %231 = vmatpush.msra.mxu0 0.0
  %232 = vmatpush.msra.mxu0 0.0
  %233 = vmatpush.msra.mxu0 %v122
  %234 = vmatpush.msra.mxu0 %v121
  %235 = vmatpush.msra.mxu0 %v120
  %236 = vmatpush.msra.mxu0 %v119
  %237 = vmatmul.f32.gmra.mxu0 %v197
  %v238 = vpop.f32.mrf.mxu0
  %v239 = vadd.f32 0.0, %v238
  %240 = vdwg.mxu0
  %v241 = vadd.f32 %v220, %v239
  %v242 = vxor.u32 %v241, 2147483648
  %v243 = vmul.f32 %v242, 1.442695
  %v244 = vpow.pop %v243
  %v245 = vadd.f32 %v244, 1.0
  %v246 = vrcp.pop %v245
  %v247 = vmul.f32 %v245, %v246
  %v248 = vsub.f32 1.0, %v247
  %v249 = vmul.f32 %v246, %v248
  %v250 = vadd.f32 %v246, %v249
  %vm251 = vweird.f32 %v245
  %vm252 = vweird.f32 %v246
  %vm253 = vmor %vm251, %vm252
  %v254 = vsel %vm253, %v246, %v250
  %v255 = vand.u32 2147483647, %v245
  %vm256 = vcmp.eq.f32.partialorder %v255, 8.507059e+37
  %v257 = vand.u32 %v245, 2147483648
  %v258 = vor.u32 1.1754944e-38, %v257
  %v259 = vsel %vm256, %v258, %v254
  %v260 = vmul.f32 1.0, %v259
  %v261 = vtanh.pop %v241
  %v262 = vmul.f32 %v260, %v184
  %264 = vrot.lane.b32.xlu0 %v261, 64
  %v265 = vpop.permute.xlu0 %264
  %v267 = vmul.f32 %v260, %v265
  %269 = vrot.lane.b32.xlu0 %v267, 32
  %v270 = vpop.permute.xlu0 %269
  %v272 = vadd.f32 %v262, %v270
  %v273 = vtanh.pop %v272
  %275 = vrot.lane.b32.xlu0 %v273, 64
  %v276 = vpop.permute.xlu0 %275
  %v278 = vmul.f32 %v260, %v276
  %280 = vrot.lane.b32.xlu0 %v278, 32
  %v281 = vpop.permute.xlu0 %280
  %v282 = vsel %vm129, %v281, 0
  %284 = vmatpush.msra.mxu0 0.0
  %285 = vmatpush.msra.mxu0 0.0
  %286 = vmatpush.msra.mxu0 0.0
  %287 = vmatpush.msra.mxu0 0.0
  %288 = vmatpush.msra.mxu0 0.0
  %289 = vmatpush.msra.mxu0 0.0
  %290 = vmatpush.msra.mxu0 0.0
  %291 = vmatpush.msra.mxu0 0.0
  %292 = vmatpush.msra.mxu0 0.0
  %293 = vmatpush.msra.mxu0 0.0
  %294 = vmatpush.msra.mxu0 0.0
  %295 = vmatpush.msra.mxu0 0.0
  %296 = vmatpush.msra.mxu0 %v126
  %297 = vmatpush.msra.mxu0 %v125
  %298 = vmatpush.msra.mxu0 %v124
  %299 = vmatpush.msra.mxu0 %v123
  %300 = vmatmul.f32.gmra.mxu0 %v282
  %v301 = vpop.f32.mrf.mxu0
  %v302 = vadd.f32 %v192, %v301
  %303 = vdwg.mxu0
  %304 = vst [vmem:[#allocation3 + $0x8] sm:$0xff] %v302
  %v305 = vld [vmem:[#allocation2 + $0x10] sm:$0xff]
  %306 = vmatpush.msra.mxu0 0.0
  %307 = vmatpush.msra.mxu0 0.0
  %308 = vmatpush.msra.mxu0 0.0
  %309 = vmatpush.msra.mxu0 0.0
  %310 = vmatpush.msra.mxu0 0.0
  %311 = vmatpush.msra.mxu0 0.0
  %312 = vmatpush.msra.mxu0 0.0
  %313 = vmatpush.msra.mxu0 0.0
  %314 = vmatpush.msra.mxu0 0.0
  %315 = vmatpush.msra.mxu0 0.0
  %316 = vmatpush.msra.mxu0 0.0
  %317 = vmatpush.msra.mxu0 0.0
  %318 = vmatpush.msra.mxu0 %v122
  %319 = vmatpush.msra.mxu0 %v121
  %320 = vmatpush.msra.mxu0 %v120
  %321 = vmatpush.msra.mxu0 %v119
  %322 = vmatmul.f32.gmra.mxu0 %v282
  %v323 = vpop.f32.mrf.mxu0
  %v324 = vadd.f32 0.0, %v323
  %325 = vdwg.mxu0
  %v326 = vadd.f32 %v305, %v324
  %v327 = vxor.u32 %v326, 2147483648
  %v328 = vmul.f32 %v327, 1.442695
  %v329 = vpow.pop %v328
  %v330 = vadd.f32 %v329, 1.0
  %v331 = vrcp.pop %v330
  %v332 = vmul.f32 %v330, %v331
  %v333 = vsub.f32 1.0, %v332
  %v334 = vmul.f32 %v331, %v333
  %v335 = vadd.f32 %v331, %v334
  %vm336 = vweird.f32 %v330
  %vm337 = vweird.f32 %v331
  %vm338 = vmor %vm336, %vm337
  %v339 = vsel %vm338, %v331, %v335
  %v340 = vand.u32 2147483647, %v330
  %vm341 = vcmp.eq.f32.partialorder %v340, 8.507059e+37
  %v342 = vand.u32 %v330, 2147483648
  %v343 = vor.u32 1.1754944e-38, %v342
  %v344 = vsel %vm341, %v343, %v339
  %v345 = vmul.f32 1.0, %v344
  %v346 = vtanh.pop %v326
  %v347 = vmul.f32 %v345, %v272
  %349 = vrot.lane.b32.xlu0 %v346, 64
  %v350 = vpop.permute.xlu0 %349
  %v352 = vmul.f32 %v345, %v350
  %354 = vrot.lane.b32.xlu0 %v352, 32
  %v355 = vpop.permute.xlu0 %354
  %v357 = vadd.f32 %v347, %v355
  %v358 = vtanh.pop %v357
  %360 = vrot.lane.b32.xlu0 %v358, 64
  %v361 = vpop.permute.xlu0 %360
  %v363 = vmul.f32 %v345, %v361
  %365 = vrot.lane.b32.xlu0 %v363, 32
  %v366 = vpop.permute.xlu0 %365
  %v367 = vsel %vm129, %v366, 0
  %369 = vmatpush.msra.mxu0 0.0
  %370 = vmatpush.msra.mxu0 0.0
  %371 = vmatpush.msra.mxu0 0.0
  %372 = vmatpush.msra.mxu0 0.0
  %373 = vmatpush.msra.mxu0 0.0
  %374 = vmatpush.msra.mxu0 0.0
  %375 = vmatpush.msra.mxu0 0.0
  %376 = vmatpush.msra.mxu0 0.0
  %377 = vmatpush.msra.mxu0 0.0
  %378 = vmatpush.msra.mxu0 0.0
  %379 = vmatpush.msra.mxu0 0.0
  %380 = vmatpush.msra.mxu0 0.0
  %381 = vmatpush.msra.mxu0 %v126
  %382 = vmatpush.msra.mxu0 %v125
  %383 = vmatpush.msra.mxu0 %v124
  %384 = vmatpush.msra.mxu0 %v123
  %385 = vmatmul.f32.gmra.mxu0 %v367
  %v386 = vpop.f32.mrf.mxu0
  %v387 = vadd.f32 %v192, %v386
  %388 = vdwg.mxu0
  %389 = vst [vmem:[#allocation3 + $0x10] sm:$0xff] %v387
  %v390 = vld [vmem:[#allocation2 + $0x18] sm:$0xff]
  %391 = vmatpush.msra.mxu0 0.0
  %392 = vmatpush.msra.mxu0 0.0
  %393 = vmatpush.msra.mxu0 0.0
  %394 = vmatpush.msra.mxu0 0.0
  %395 = vmatpush.msra.mxu0 0.0
  %396 = vmatpush.msra.mxu0 0.0
  %397 = vmatpush.msra.mxu0 0.0
  %398 = vmatpush.msra.mxu0 0.0
  %399 = vmatpush.msra.mxu0 0.0
  %400 = vmatpush.msra.mxu0 0.0
  %401 = vmatpush.msra.mxu0 0.0
  %402 = vmatpush.msra.mxu0 0.0
  %403 = vmatpush.msra.mxu0 %v122
  %404 = vmatpush.msra.mxu0 %v121
  %405 = vmatpush.msra.mxu0 %v120
  %406 = vmatpush.msra.mxu0 %v119
  %407 = vmatmul.f32.gmra.mxu0 %v367
  %v408 = vpop.f32.mrf.mxu0
  %v409 = vadd.f32 0.0, %v408
  %410 = vdwg.mxu0
  %v411 = vadd.f32 %v390, %v409
  %v412 = vxor.u32 %v411, 2147483648
  %v413 = vmul.f32 %v412, 1.442695
  %v414 = vpow.pop %v413
  %v415 = vadd.f32 %v414, 1.0
  %v416 = vrcp.pop %v415
  %v417 = vmul.f32 %v415, %v416
  %v418 = vsub.f32 1.0, %v417
  %v419 = vmul.f32 %v416, %v418
  %v420 = vadd.f32 %v416, %v419
  %vm421 = vweird.f32 %v415
  %vm422 = vweird.f32 %v416
  %vm423 = vmor %vm421, %vm422
  %v424 = vsel %vm423, %v416, %v420
  %v425 = vand.u32 2147483647, %v415
  %vm426 = vcmp.eq.f32.partialorder %v425, 8.507059e+37
  %v427 = vand.u32 %v415, 2147483648
  %v428 = vor.u32 1.1754944e-38, %v427
  %v429 = vsel %vm426, %v428, %v424
  %v430 = vmul.f32 1.0, %v429
  %v431 = vtanh.pop %v411
  %v432 = vmul.f32 %v430, %v357
  %434 = vrot.lane.b32.xlu0 %v431, 64
  %v435 = vpop.permute.xlu0 %434
  %v437 = vmul.f32 %v430, %v435
  %439 = vrot.lane.b32.xlu0 %v437, 32
  %v440 = vpop.permute.xlu0 %439
  %v442 = vadd.f32 %v432, %v440
  %v443 = vtanh.pop %v442
  %445 = vrot.lane.b32.xlu0 %v443, 64
  %v446 = vpop.permute.xlu0 %445
  %v448 = vmul.f32 %v430, %v446
  %450 = vrot.lane.b32.xlu0 %v448, 32
  %v451 = vpop.permute.xlu0 %450
  %v452 = vsel %vm129, %v451, 0
  %454 = vmatpush.msra.mxu0 0.0
  %455 = vmatpush.msra.mxu0 0.0
  %456 = vmatpush.msra.mxu0 0.0
  %457 = vmatpush.msra.mxu0 0.0
  %458 = vmatpush.msra.mxu0 0.0
  %459 = vmatpush.msra.mxu0 0.0
  %460 = vmatpush.msra.mxu0 0.0
  %461 = vmatpush.msra.mxu0 0.0
  %462 = vmatpush.msra.mxu0 0.0
  %463 = vmatpush.msra.mxu0 0.0
  %464 = vmatpush.msra.mxu0 0.0
  %465 = vmatpush.msra.mxu0 0.0
  %466 = vmatpush.msra.mxu0 %v126
  %467 = vmatpush.msra.mxu0 %v125
  %468 = vmatpush.msra.mxu0 %v124
  %469 = vmatpush.msra.mxu0 %v123
  %470 = vmatmul.f32.gmra.mxu0 %v452
  %v471 = vpop.f32.mrf.mxu0
  %v472 = vadd.f32 %v192, %v471
  %473 = vdwg.mxu0
  %474 = vst [vmem:[#allocation3 + $0x18] sm:$0xff] %v472
  %v475 = vld [vmem:[#allocation2 + $0x20] sm:$0xff]
  %476 = vmatpush.msra.mxu0 0.0
  %477 = vmatpush.msra.mxu0 0.0
  %478 = vmatpush.msra.mxu0 0.0
  %479 = vmatpush.msra.mxu0 0.0
  %480 = vmatpush.msra.mxu0 0.0
  %481 = vmatpush.msra.mxu0 0.0
  %482 = vmatpush.msra.mxu0 0.0
  %483 = vmatpush.msra.mxu0 0.0
  %484 = vmatpush.msra.mxu0 0.0
  %485 = vmatpush.msra.mxu0 0.0
  %486 = vmatpush.msra.mxu0 0.0
  %487 = vmatpush.msra.mxu0 0.0
  %488 = vmatpush.msra.mxu0 %v122
  %489 = vmatpush.msra.mxu0 %v121
  %490 = vmatpush.msra.mxu0 %v120
  %491 = vmatpush.msra.mxu0 %v119
  %492 = vmatmul.f32.gmra.mxu0 %v452
  %v493 = vpop.f32.mrf.mxu0
  %v494 = vadd.f32 0.0, %v493
  %495 = vdwg.mxu0
  %v496 = vadd.f32 %v475, %v494
  %v497 = vxor.u32 %v496, 2147483648
  %v498 = vmul.f32 %v497, 1.442695
  %v499 = vpow.pop %v498
  %v500 = vadd.f32 %v499, 1.0
  %v501 = vrcp.pop %v500
  %v502 = vmul.f32 %v500, %v501
  %v503 = vsub.f32 1.0, %v502
  %v504 = vmul.f32 %v501, %v503
  %v505 = vadd.f32 %v501, %v504
  %vm506 = vweird.f32 %v500
  %vm507 = vweird.f32 %v501
  %vm508 = vmor %vm506, %vm507
  %v509 = vsel %vm508, %v501, %v505
  %v510 = vand.u32 2147483647, %v500
  %vm511 = vcmp.eq.f32.partialorder %v510, 8.507059e+37
  %v512 = vand.u32 %v500, 2147483648
  %v513 = vor.u32 1.1754944e-38, %v512
  %v514 = vsel %vm511, %v513, %v509
  %v515 = vmul.f32 1.0, %v514
  %v516 = vtanh.pop %v496
  %v517 = vmul.f32 %v515, %v442
  %519 = vrot.lane.b32.xlu0 %v516, 64
  %v520 = vpop.permute.xlu0 %519
  %v522 = vmul.f32 %v515, %v520
  %524 = vrot.lane.b32.xlu0 %v522, 32
  %v525 = vpop.permute.xlu0 %524
  %v527 = vadd.f32 %v517, %v525
  %v528 = vtanh.pop %v527
  %530 = vrot.lane.b32.xlu0 %v528, 64
  %v531 = vpop.permute.xlu0 %530
  %v533 = vmul.f32 %v515, %v531
  %535 = vrot.lane.b32.xlu0 %v533, 32
  %v536 = vpop.permute.xlu0 %535
  %v537 = vsel %vm129, %v536, 0
  %539 = vmatpush.msra.mxu0 0.0
  %540 = vmatpush.msra.mxu0 0.0
  %541 = vmatpush.msra.mxu0 0.0
  %542 = vmatpush.msra.mxu0 0.0
  %543 = vmatpush.msra.mxu0 0.0
  %544 = vmatpush.msra.mxu0 0.0
  %545 = vmatpush.msra.mxu0 0.0
  %546 = vmatpush.msra.mxu0 0.0
  %547 = vmatpush.msra.mxu0 0.0
  %548 = vmatpush.msra.mxu0 0.0
  %549 = vmatpush.msra.mxu0 0.0
  %550 = vmatpush.msra.mxu0 0.0
  %551 = vmatpush.msra.mxu0 %v126
  %552 = vmatpush.msra.mxu0 %v125
  %553 = vmatpush.msra.mxu0 %v124
  %554 = vmatpush.msra.mxu0 %v123
  %555 = vmatmul.f32.gmra.mxu0 %v537
  %v556 = vpop.f32.mrf.mxu0
  %v557 = vadd.f32 %v192, %v556
  %558 = vdwg.mxu0
  %559 = vst [vmem:[#allocation3 + $0x20] sm:$0xff] %v557
  %v560 = vld [vmem:[#allocation2 + $0x28] sm:$0xff]
  %561 = vmatpush.msra.mxu0 0.0
  %562 = vmatpush.msra.mxu0 0.0
  %563 = vmatpush.msra.mxu0 0.0
  %564 = vmatpush.msra.mxu0 0.0
  %565 = vmatpush.msra.mxu0 0.0
  %566 = vmatpush.msra.mxu0 0.0
  %567 = vmatpush.msra.mxu0 0.0
  %568 = vmatpush.msra.mxu0 0.0
  %569 = vmatpush.msra.mxu0 0.0
  %570 = vmatpush.msra.mxu0 0.0
  %571 = vmatpush.msra.mxu0 0.0
  %572 = vmatpush.msra.mxu0 0.0
  %573 = vmatpush.msra.mxu0 %v122
  %574 = vmatpush.msra.mxu0 %v121
  %575 = vmatpush.msra.mxu0 %v120
  %576 = vmatpush.msra.mxu0 %v119
  %577 = vmatmul.f32.gmra.mxu0 %v537
  %v578 = vpop.f32.mrf.mxu0
  %v579 = vadd.f32 0.0, %v578
  %580 = vdwg.mxu0
  %v581 = vadd.f32 %v560, %v579
  %v582 = vxor.u32 %v581, 2147483648
  %v583 = vmul.f32 %v582, 1.442695
  %v584 = vpow.pop %v583
  %v585 = vadd.f32 %v584, 1.0
  %v586 = vrcp.pop %v585
  %v587 = vmul.f32 %v585, %v586
  %v588 = vsub.f32 1.0, %v587
  %v589 = vmul.f32 %v586, %v588
  %v590 = vadd.f32 %v586, %v589
  %vm591 = vweird.f32 %v585
  %vm592 = vweird.f32 %v586
  %vm593 = vmor %vm591, %vm592
  %v594 = vsel %vm593, %v586, %v590
  %v595 = vand.u32 2147483647, %v585
  %vm596 = vcmp.eq.f32.partialorder %v595, 8.507059e+37
  %v597 = vand.u32 %v585, 2147483648
  %v598 = vor.u32 1.1754944e-38, %v597
  %v599 = vsel %vm596, %v598, %v594
  %v600 = vmul.f32 1.0, %v599
  %v601 = vtanh.pop %v581
  %v602 = vmul.f32 %v600, %v527
  %604 = vrot.lane.b32.xlu0 %v601, 64
  %v605 = vpop.permute.xlu0 %604
  %v607 = vmul.f32 %v600, %v605
  %609 = vrot.lane.b32.xlu0 %v607, 32
  %v610 = vpop.permute.xlu0 %609
  %v612 = vadd.f32 %v602, %v610
  %v613 = vtanh.pop %v612
  %615 = vrot.lane.b32.xlu0 %v613, 64
  %v616 = vpop.permute.xlu0 %615
  %v618 = vmul.f32 %v600, %v616
  %620 = vrot.lane.b32.xlu0 %v618, 32
  %v621 = vpop.permute.xlu0 %620
  %v622 = vsel %vm129, %v621, 0
  %624 = vmatpush.msra.mxu0 0.0
  %625 = vmatpush.msra.mxu0 0.0
  %626 = vmatpush.msra.mxu0 0.0
  %627 = vmatpush.msra.mxu0 0.0
  %628 = vmatpush.msra.mxu0 0.0
  %629 = vmatpush.msra.mxu0 0.0
  %630 = vmatpush.msra.mxu0 0.0
  %631 = vmatpush.msra.mxu0 0.0
  %632 = vmatpush.msra.mxu0 0.0
  %633 = vmatpush.msra.mxu0 0.0
  %634 = vmatpush.msra.mxu0 0.0
  %635 = vmatpush.msra.mxu0 0.0
  %636 = vmatpush.msra.mxu0 %v126
  %637 = vmatpush.msra.mxu0 %v125
  %638 = vmatpush.msra.mxu0 %v124
  %639 = vmatpush.msra.mxu0 %v123
  %640 = vmatmul.f32.gmra.mxu0 %v622
  %v641 = vpop.f32.mrf.mxu0
  %v642 = vadd.f32 %v192, %v641
  %643 = vdwg.mxu0
  %644 = vst [vmem:[#allocation3 + $0x28] sm:$0xff] %v642
  %v645 = vld [vmem:[#allocation2 + $0x30] sm:$0xff]
  %646 = vmatpush.msra.mxu0 0.0
  %647 = vmatpush.msra.mxu0 0.0
  %648 = vmatpush.msra.mxu0 0.0
  %649 = vmatpush.msra.mxu0 0.0
  %650 = vmatpush.msra.mxu0 0.0
  %651 = vmatpush.msra.mxu0 0.0
  %652 = vmatpush.msra.mxu0 0.0
  %653 = vmatpush.msra.mxu0 0.0
  %654 = vmatpush.msra.mxu0 0.0
  %655 = vmatpush.msra.mxu0 0.0
  %656 = vmatpush.msra.mxu0 0.0
  %657 = vmatpush.msra.mxu0 0.0
  %658 = vmatpush.msra.mxu0 %v122
  %659 = vmatpush.msra.mxu0 %v121
  %660 = vmatpush.msra.mxu0 %v120
  %661 = vmatpush.msra.mxu0 %v119
  %662 = vmatmul.f32.gmra.mxu0 %v622
  %v663 = vpop.f32.mrf.mxu0
  %v664 = vadd.f32 0.0, %v663
  %665 = vdwg.mxu0
  %v666 = vadd.f32 %v645, %v664
  %v667 = vxor.u32 %v666, 2147483648
  %v668 = vmul.f32 %v667, 1.442695
  %v669 = vpow.pop %v668
  %v670 = vadd.f32 %v669, 1.0
  %v671 = vrcp.pop %v670
  %v672 = vmul.f32 %v670, %v671
  %v673 = vsub.f32 1.0, %v672
  %v674 = vmul.f32 %v671, %v673
  %v675 = vadd.f32 %v671, %v674
  %vm676 = vweird.f32 %v670
  %vm677 = vweird.f32 %v671
  %vm678 = vmor %vm676, %vm677
  %v679 = vsel %vm678, %v671, %v675
  %v680 = vand.u32 2147483647, %v670
  %vm681 = vcmp.eq.f32.partialorder %v680, 8.507059e+37
  %v682 = vand.u32 %v670, 2147483648
  %v683 = vor.u32 1.1754944e-38, %v682
  %v684 = vsel %vm681, %v683, %v679
  %v685 = vmul.f32 1.0, %v684
  %v686 = vtanh.pop %v666
  %v687 = vmul.f32 %v685, %v612
  %689 = vrot.lane.b32.xlu0 %v686, 64
  %v690 = vpop.permute.xlu0 %689
  %v692 = vmul.f32 %v685, %v690
  %694 = vrot.lane.b32.xlu0 %v692, 32
  %v695 = vpop.permute.xlu0 %694
  %v697 = vadd.f32 %v687, %v695
  %v698 = vtanh.pop %v697
  %700 = vrot.lane.b32.xlu0 %v698, 64
  %v701 = vpop.permute.xlu0 %700
  %v703 = vmul.f32 %v685, %v701
  %705 = vrot.lane.b32.xlu0 %v703, 32
  %v706 = vpop.permute.xlu0 %705
  %v707 = vsel %vm129, %v706, 0
  %709 = vmatpush.msra.mxu0 0.0
  %710 = vmatpush.msra.mxu0 0.0
  %711 = vmatpush.msra.mxu0 0.0
  %712 = vmatpush.msra.mxu0 0.0
  %713 = vmatpush.msra.mxu0 0.0
  %714 = vmatpush.msra.mxu0 0.0
  %715 = vmatpush.msra.mxu0 0.0
  %716 = vmatpush.msra.mxu0 0.0
  %717 = vmatpush.msra.mxu0 0.0
  %718 = vmatpush.msra.mxu0 0.0
  %719 = vmatpush.msra.mxu0 0.0
  %720 = vmatpush.msra.mxu0 0.0
  %721 = vmatpush.msra.mxu0 %v126
  %722 = vmatpush.msra.mxu0 %v125
  %723 = vmatpush.msra.mxu0 %v124
  %724 = vmatpush.msra.mxu0 %v123
  %725 = vmatmul.f32.gmra.mxu0 %v707
  %v726 = vpop.f32.mrf.mxu0
  %v727 = vadd.f32 %v192, %v726
  %728 = vdwg.mxu0
  %729 = vst [vmem:[#allocation3 + $0x30] sm:$0xff] %v727
  %v730 = vld [vmem:[#allocation2 + $0x38] sm:$0xff]
  %731 = vmatpush.msra.mxu0 0.0
  %732 = vmatpush.msra.mxu0 0.0
  %733 = vmatpush.msra.mxu0 0.0
  %734 = vmatpush.msra.mxu0 0.0
  %735 = vmatpush.msra.mxu0 0.0
  %736 = vmatpush.msra.mxu0 0.0
  %737 = vmatpush.msra.mxu0 0.0
  %738 = vmatpush.msra.mxu0 0.0
  %739 = vmatpush.msra.mxu0 0.0
  %740 = vmatpush.msra.mxu0 0.0
  %741 = vmatpush.msra.mxu0 0.0
  %742 = vmatpush.msra.mxu0 0.0
  %743 = vmatpush.msra.mxu0 %v122
  %744 = vmatpush.msra.mxu0 %v121
  %745 = vmatpush.msra.mxu0 %v120
  %746 = vmatpush.msra.mxu0 %v119
  %747 = vmatmul.f32.gmra.mxu0 %v707
  %v748 = vpop.f32.mrf.mxu0
  %v749 = vadd.f32 0.0, %v748
  %750 = vdwg.mxu0
  %v751 = vadd.f32 %v730, %v749
  %v752 = vxor.u32 %v751, 2147483648
  %v753 = vmul.f32 %v752, 1.442695
  %v754 = vpow.pop %v753
  %v755 = vadd.f32 %v754, 1.0
  %v756 = vrcp.pop %v755
  %v757 = vmul.f32 %v755, %v756
  %v758 = vsub.f32 1.0, %v757
  %v759 = vmul.f32 %v756, %v758
  %v760 = vadd.f32 %v756, %v759
  %vm761 = vweird.f32 %v755
  %vm762 = vweird.f32 %v756
  %vm763 = vmor %vm761, %vm762
  %v764 = vsel %vm763, %v756, %v760
  %v765 = vand.u32 2147483647, %v755
  %vm766 = vcmp.eq.f32.partialorder %v765, 8.507059e+37
  %v767 = vand.u32 %v755, 2147483648
  %v768 = vor.u32 1.1754944e-38, %v767
  %v769 = vsel %vm766, %v768, %v764
  %v770 = vmul.f32 1.0, %v769
  %v771 = vtanh.pop %v751
  %v772 = vmul.f32 %v770, %v697
  %774 = vrot.lane.b32.xlu0 %v771, 64
  %v775 = vpop.permute.xlu0 %774
  %v777 = vmul.f32 %v770, %v775
  %779 = vrot.lane.b32.xlu0 %v777, 32
  %v780 = vpop.permute.xlu0 %779
  %v782 = vadd.f32 %v772, %v780
  %v783 = vtanh.pop %v782
  %785 = vrot.lane.b32.xlu0 %v783, 64
  %v786 = vpop.permute.xlu0 %785
  %v788 = vmul.f32 %v770, %v786
  %790 = vrot.lane.b32.xlu0 %v788, 32
  %v791 = vpop.permute.xlu0 %790
  %v792 = vsel %vm129, %v791, 0
  %794 = vmatpush.msra.mxu0 0.0
  %795 = vmatpush.msra.mxu0 0.0
  %796 = vmatpush.msra.mxu0 0.0
  %797 = vmatpush.msra.mxu0 0.0
  %798 = vmatpush.msra.mxu0 0.0
  %799 = vmatpush.msra.mxu0 0.0
  %800 = vmatpush.msra.mxu0 0.0
  %801 = vmatpush.msra.mxu0 0.0
  %802 = vmatpush.msra.mxu0 0.0
  %803 = vmatpush.msra.mxu0 0.0
  %804 = vmatpush.msra.mxu0 0.0
  %805 = vmatpush.msra.mxu0 0.0
  %806 = vmatpush.msra.mxu0 %v126
  %807 = vmatpush.msra.mxu0 %v125
  %808 = vmatpush.msra.mxu0 %v124
  %809 = vmatpush.msra.mxu0 %v123
  %810 = vmatmul.f32.gmra.mxu0 %v792
  %v811 = vpop.f32.mrf.mxu0
  %v812 = vadd.f32 %v192, %v811
  %813 = vdwg.mxu0
  %814 = vst [vmem:[#allocation3 + $0x38] sm:$0xff] %v812
  %v815 = vld [vmem:[%s7] sm:$0xff]
  %v816 = vld [vmem:[%s7 + $0x8] sm:$0xff]
  %v817 = vld [vmem:[%s7 + $0x10] sm:$0xff]
  %v818 = vld [vmem:[%s7 + $0x18] sm:$0xff]
  %v819 = vld [vmem:[%s8] sm:$0x1]
  %v821 = vperm.slane %v819, 0
  %823 = vmatpush.msra.mxu0 0.0
  %824 = vmatpush.msra.mxu0 0.0
  %825 = vmatpush.msra.mxu0 0.0
  %826 = vmatpush.msra.mxu0 0.0
  %827 = vmatpush.msra.mxu0 0.0
  %828 = vmatpush.msra.mxu0 0.0
  %829 = vmatpush.msra.mxu0 0.0
  %830 = vmatpush.msra.mxu0 0.0
  %831 = vmatpush.msra.mxu0 0.0
  %832 = vmatpush.msra.mxu0 0.0
  %833 = vmatpush.msra.mxu0 0.0
  %834 = vmatpush.msra.mxu0 0.0
  %835 = vmatpush.msra.mxu0 %v818
  %836 = vmatpush.msra.mxu0 %v817
  %837 = vmatpush.msra.mxu0 %v816
  %838 = vmatpush.msra.mxu0 %v815
  %839 = vmatmul.f32.gmra.mxu0 %v792
  %v840 = vpop.f32.mrf.mxu0
  %v841 = vadd.f32 %v821, %v840
  %842 = vdwg.mxu0
  %843 = vst [vmem:[%s9] sm:$0xff] %v841
  %v844 = vld [vmem:[%s5] sm:$0xff]
  %v845 = vld [vmem:[%s5 + $0x8] sm:$0xff]
  %v846 = vld [vmem:[%s5 + $0x10] sm:$0xff]
  %v847 = vld [vmem:[%s5 + $0x18] sm:$0xff]
  %v848 = vld [vmem:[#allocation3] sm:$0xff]
  %849 = vmatpush.msra.mxu0 0.0
  %850 = vmatpush.msra.mxu0 0.0
  %851 = vmatpush.msra.mxu0 0.0
  %852 = vmatpush.msra.mxu0 0.0
  %853 = vmatpush.msra.mxu0 0.0
  %854 = vmatpush.msra.mxu0 0.0
  %855 = vmatpush.msra.mxu0 0.0
  %856 = vmatpush.msra.mxu0 0.0
  %857 = vmatpush.msra.mxu0 0.0
  %858 = vmatpush.msra.mxu0 0.0
  %859 = vmatpush.msra.mxu0 0.0
  %860 = vmatpush.msra.mxu0 0.0
  %861 = vmatpush.msra.mxu0 %v847
  %862 = vmatpush.msra.mxu0 %v846
  %863 = vmatpush.msra.mxu0 %v845
  %864 = vmatpush.msra.mxu0 %v844
  %865 = vmatmul.f32.gmra.mxu0 %v131
  %v866 = vpop.f32.mrf.mxu0
  %v867 = vadd.f32 0.0, %v866
  %868 = vdwg.mxu0
  %v869 = vadd.f32 %v848, %v867
  %v870 = vxor.u32 %v869, 2147483648
  %v871 = vmul.f32 %v870, 1.442695
  %v872 = vpow.pop %v871
  %v873 = vadd.f32 %v872, 1.0
  %v874 = vrcp.pop %v873
  %v875 = vmul.f32 %v873, %v874
  %v876 = vsub.f32 1.0, %v875
  %v877 = vmul.f32 %v874, %v876
  %v878 = vadd.f32 %v874, %v877
  %vm879 = vweird.f32 %v873
  %vm880 = vweird.f32 %v874
  %vm881 = vmor %vm879, %vm880
  %v882 = vsel %vm881, %v874, %v878
  %v883 = vand.u32 2147483647, %v873
  %vm884 = vcmp.eq.f32.partialorder %v883, 8.507059e+37
  %v885 = vand.u32 %v873, 2147483648
  %v886 = vor.u32 1.1754944e-38, %v885
  %v887 = vsel %vm884, %v886, %v882
  %v888 = vmul.f32 1.0, %v887
  %v889 = vtanh.pop %v869
  %v890 = vmul.f32 %v888, 0.0
  %892 = vrot.lane.b32.xlu0 %v889, 64
  %v893 = vpop.permute.xlu0 %892
  %v895 = vmul.f32 %v888, %v893
  %897 = vrot.lane.b32.xlu0 %v895, 32
  %v898 = vpop.permute.xlu0 %897
  %v900 = vadd.f32 %v890, %v898
  %v901 = vtanh.pop %v900
  %903 = vrot.lane.b32.xlu0 %v901, 64
  %v904 = vpop.permute.xlu0 %903
  %v906 = vmul.f32 %v888, %v904
  %v907 = vld [vmem:[#allocation3 + $0x8] sm:$0xff]
  %909 = vrot.lane.b32.xlu0 %v906, 32
  %v910 = vpop.permute.xlu0 %909
  %v911 = vsel %vm129, %v910, 0
  %913 = vmatpush.msra.mxu0 0.0
  %914 = vmatpush.msra.mxu0 0.0
  %915 = vmatpush.msra.mxu0 0.0
  %916 = vmatpush.msra.mxu0 0.0
  %917 = vmatpush.msra.mxu0 0.0
  %918 = vmatpush.msra.mxu0 0.0
  %919 = vmatpush.msra.mxu0 0.0
  %920 = vmatpush.msra.mxu0 0.0
  %921 = vmatpush.msra.mxu0 0.0
  %922 = vmatpush.msra.mxu0 0.0
  %923 = vmatpush.msra.mxu0 0.0
  %924 = vmatpush.msra.mxu0 0.0
  %925 = vmatpush.msra.mxu0 %v847
  %926 = vmatpush.msra.mxu0 %v846
  %927 = vmatpush.msra.mxu0 %v845
  %928 = vmatpush.msra.mxu0 %v844
  %929 = vmatmul.f32.gmra.mxu0 %v911
  %v930 = vpop.f32.mrf.mxu0
  %v931 = vadd.f32 0.0, %v930
  %932 = vdwg.mxu0
  %v933 = vadd.f32 %v907, %v931
  %v934 = vxor.u32 %v933, 2147483648
  %v935 = vmul.f32 %v934, 1.442695
  %v936 = vpow.pop %v935
  %v937 = vadd.f32 %v936, 1.0
  %v938 = vrcp.pop %v937
  %v939 = vmul.f32 %v937, %v938
  %v940 = vsub.f32 1.0, %v939
  %v941 = vmul.f32 %v938, %v940
  %v942 = vadd.f32 %v938, %v941
  %vm943 = vweird.f32 %v937
  %vm944 = vweird.f32 %v938
  %vm945 = vmor %vm943, %vm944
  %v946 = vsel %vm945, %v938, %v942
  %v947 = vand.u32 2147483647, %v937
  %vm948 = vcmp.eq.f32.partialorder %v947, 8.507059e+37
  %v949 = vand.u32 %v937, 2147483648
  %v950 = vor.u32 1.1754944e-38, %v949
  %v951 = vsel %vm948, %v950, %v946
  %v952 = vmul.f32 1.0, %v951
  %v953 = vtanh.pop %v933
  %v954 = vmul.f32 %v952, %v900
  %956 = vrot.lane.b32.xlu0 %v953, 64
  %v957 = vpop.permute.xlu0 %956
  %v959 = vmul.f32 %v952, %v957
  %961 = vrot.lane.b32.xlu0 %v959, 32
  %v962 = vpop.permute.xlu0 %961
  %v964 = vadd.f32 %v954, %v962
  %v965 = vtanh.pop %v964
  %967 = vrot.lane.b32.xlu0 %v965, 64
  %v968 = vpop.permute.xlu0 %967
  %v970 = vmul.f32 %v952, %v968
  %v971 = vld [vmem:[#allocation3 + $0x10] sm:$0xff]
  %973 = vrot.lane.b32.xlu0 %v970, 32
  %v974 = vpop.permute.xlu0 %973
  %v975 = vsel %vm129, %v974, 0
  %977 = vmatpush.msra.mxu0 0.0
  %978 = vmatpush.msra.mxu0 0.0
  %979 = vmatpush.msra.mxu0 0.0
  %980 = vmatpush.msra.mxu0 0.0
  %981 = vmatpush.msra.mxu0 0.0
  %982 = vmatpush.msra.mxu0 0.0
  %983 = vmatpush.msra.mxu0 0.0
  %984 = vmatpush.msra.mxu0 0.0
  %985 = vmatpush.msra.mxu0 0.0
  %986 = vmatpush.msra.mxu0 0.0
  %987 = vmatpush.msra.mxu0 0.0
  %988 = vmatpush.msra.mxu0 0.0
  %989 = vmatpush.msra.mxu0 %v847
  %990 = vmatpush.msra.mxu0 %v846
  %991 = vmatpush.msra.mxu0 %v845
  %992 = vmatpush.msra.mxu0 %v844
  %993 = vmatmul.f32.gmra.mxu0 %v975
  %v994 = vpop.f32.mrf.mxu0
  %v995 = vadd.f32 0.0, %v994
  %996 = vdwg.mxu0
  %v997 = vadd.f32 %v971, %v995
  %v998 = vxor.u32 %v997, 2147483648
  %v999 = vmul.f32 %v998, 1.442695
  %v1000 = vpow.pop %v999
  %v1001 = vadd.f32 %v1000, 1.0
  %v1002 = vrcp.pop %v1001
  %v1003 = vmul.f32 %v1001, %v1002
  %v1004 = vsub.f32 1.0, %v1003
  %v1005 = vmul.f32 %v1002, %v1004
  %v1006 = vadd.f32 %v1002, %v1005
  %vm1007 = vweird.f32 %v1001
  %vm1008 = vweird.f32 %v1002
  %vm1009 = vmor %vm1007, %vm1008
  %v1010 = vsel %vm1009, %v1002, %v1006
  %v1011 = vand.u32 2147483647, %v1001
  %vm1012 = vcmp.eq.f32.partialorder %v1011, 8.507059e+37
  %v1013 = vand.u32 %v1001, 2147483648
  %v1014 = vor.u32 1.1754944e-38, %v1013
  %v1015 = vsel %vm1012, %v1014, %v1010
  %v1016 = vmul.f32 1.0, %v1015
  %v1017 = vtanh.pop %v997
  %v1018 = vmul.f32 %v1016, %v964
  %1020 = vrot.lane.b32.xlu0 %v1017, 64
  %v1021 = vpop.permute.xlu0 %1020
  %v1023 = vmul.f32 %v1016, %v1021
  %1025 = vrot.lane.b32.xlu0 %v1023, 32
  %v1026 = vpop.permute.xlu0 %1025
  %v1028 = vadd.f32 %v1018, %v1026
  %v1029 = vtanh.pop %v1028
  %1031 = vrot.lane.b32.xlu0 %v1029, 64
  %v1032 = vpop.permute.xlu0 %1031
  %v1034 = vmul.f32 %v1016, %v1032
  %v1035 = vld [vmem:[#allocation3 + $0x18] sm:$0xff]
  %1037 = vrot.lane.b32.xlu0 %v1034, 32
  %v1038 = vpop.permute.xlu0 %1037
  %v1039 = vsel %vm129, %v1038, 0
  %1041 = vmatpush.msra.mxu0 0.0
  %1042 = vmatpush.msra.mxu0 0.0
  %1043 = vmatpush.msra.mxu0 0.0
  %1044 = vmatpush.msra.mxu0 0.0
  %1045 = vmatpush.msra.mxu0 0.0
  %1046 = vmatpush.msra.mxu0 0.0
  %1047 = vmatpush.msra.mxu0 0.0
  %1048 = vmatpush.msra.mxu0 0.0
  %1049 = vmatpush.msra.mxu0 0.0
  %1050 = vmatpush.msra.mxu0 0.0
  %1051 = vmatpush.msra.mxu0 0.0
  %1052 = vmatpush.msra.mxu0 0.0
  %1053 = vmatpush.msra.mxu0 %v847
  %1054 = vmatpush.msra.mxu0 %v846
  %1055 = vmatpush.msra.mxu0 %v845
  %1056 = vmatpush.msra.mxu0 %v844
  %1057 = vmatmul.f32.gmra.mxu0 %v1039
  %v1058 = vpop.f32.mrf.mxu0
  %v1059 = vadd.f32 0.0, %v1058
  %1060 = vdwg.mxu0
  %v1061 = vadd.f32 %v1035, %v1059
  %v1062 = vxor.u32 %v1061, 2147483648
  %v1063 = vmul.f32 %v1062, 1.442695
  %v1064 = vpow.pop %v1063
  %v1065 = vadd.f32 %v1064, 1.0
  %v1066 = vrcp.pop %v1065
  %v1067 = vmul.f32 %v1065, %v1066
  %v1068 = vsub.f32 1.0, %v1067
  %v1069 = vmul.f32 %v1066, %v1068
  %v1070 = vadd.f32 %v1066, %v1069
  %vm1071 = vweird.f32 %v1065
  %vm1072 = vweird.f32 %v1066
  %vm1073 = vmor %vm1071, %vm1072
  %v1074 = vsel %vm1073, %v1066, %v1070
  %v1075 = vand.u32 2147483647, %v1065
  %vm1076 = vcmp.eq.f32.partialorder %v1075, 8.507059e+37
  %v1077 = vand.u32 %v1065, 2147483648
  %v1078 = vor.u32 1.1754944e-38, %v1077
  %v1079 = vsel %vm1076, %v1078, %v1074
  %v1080 = vmul.f32 1.0, %v1079
  %v1081 = vtanh.pop %v1061
  %v1082 = vmul.f32 %v1080, %v1028
  %1084 = vrot.lane.b32.xlu0 %v1081, 64
  %v1085 = vpop.permute.xlu0 %1084
  %v1087 = vmul.f32 %v1080, %v1085
  %1089 = vrot.lane.b32.xlu0 %v1087, 32
  %v1090 = vpop.permute.xlu0 %1089
  %v1092 = vadd.f32 %v1082, %v1090
  %v1093 = vtanh.pop %v1092
  %1095 = vrot.lane.b32.xlu0 %v1093, 64
  %v1096 = vpop.permute.xlu0 %1095
  %v1098 = vmul.f32 %v1080, %v1096
  %v1099 = vld [vmem:[#allocation3 + $0x20] sm:$0xff]
  %1101 = vrot.lane.b32.xlu0 %v1098, 32
  %v1102 = vpop.permute.xlu0 %1101
  %v1103 = vsel %vm129, %v1102, 0
  %1105 = vmatpush.msra.mxu0 0.0
  %1106 = vmatpush.msra.mxu0 0.0
  %1107 = vmatpush.msra.mxu0 0.0
  %1108 = vmatpush.msra.mxu0 0.0
  %1109 = vmatpush.msra.mxu0 0.0
  %1110 = vmatpush.msra.mxu0 0.0
  %1111 = vmatpush.msra.mxu0 0.0
  %1112 = vmatpush.msra.mxu0 0.0
  %1113 = vmatpush.msra.mxu0 0.0
  %1114 = vmatpush.msra.mxu0 0.0
  %1115 = vmatpush.msra.mxu0 0.0
  %1116 = vmatpush.msra.mxu0 0.0
  %1117 = vmatpush.msra.mxu0 %v847
  %1118 = vmatpush.msra.mxu0 %v846
  %1119 = vmatpush.msra.mxu0 %v845
  %1120 = vmatpush.msra.mxu0 %v844
  %1121 = vmatmul.f32.gmra.mxu0 %v1103
  %v1122 = vpop.f32.mrf.mxu0
  %v1123 = vadd.f32 0.0, %v1122
  %1124 = vdwg.mxu0
  %v1125 = vadd.f32 %v1099, %v1123
  %v1126 = vxor.u32 %v1125, 2147483648
  %v1127 = vmul.f32 %v1126, 1.442695
  %v1128 = vpow.pop %v1127
  %v1129 = vadd.f32 %v1128, 1.0
  %v1130 = vrcp.pop %v1129
  %v1131 = vmul.f32 %v1129, %v1130
  %v1132 = vsub.f32 1.0, %v1131
  %v1133 = vmul.f32 %v1130, %v1132
  %v1134 = vadd.f32 %v1130, %v1133
  %vm1135 = vweird.f32 %v1129
  %vm1136 = vweird.f32 %v1130
  %vm1137 = vmor %vm1135, %vm1136
  %v1138 = vsel %vm1137, %v1130, %v1134
  %v1139 = vand.u32 2147483647, %v1129
  %vm1140 = vcmp.eq.f32.partialorder %v1139, 8.507059e+37
  %v1141 = vand.u32 %v1129, 2147483648
  %v1142 = vor.u32 1.1754944e-38, %v1141
  %v1143 = vsel %vm1140, %v1142, %v1138
  %v1144 = vmul.f32 1.0, %v1143
  %v1145 = vtanh.pop %v1125
  %v1146 = vmul.f32 %v1144, %v1092
  %1148 = vrot.lane.b32.xlu0 %v1145, 64
  %v1149 = vpop.permute.xlu0 %1148
  %v1151 = vmul.f32 %v1144, %v1149
  %1153 = vrot.lane.b32.xlu0 %v1151, 32
  %v1154 = vpop.permute.xlu0 %1153
  %v1156 = vadd.f32 %v1146, %v1154
  %v1157 = vtanh.pop %v1156
  %1159 = vrot.lane.b32.xlu0 %v1157, 64
  %v1160 = vpop.permute.xlu0 %1159
  %v1162 = vmul.f32 %v1144, %v1160
  %v1163 = vld [vmem:[#allocation3 + $0x28] sm:$0xff]
  %1165 = vrot.lane.b32.xlu0 %v1162, 32
  %v1166 = vpop.permute.xlu0 %1165
  %v1167 = vsel %vm129, %v1166, 0
  %1169 = vmatpush.msra.mxu0 0.0
  %1170 = vmatpush.msra.mxu0 0.0
  %1171 = vmatpush.msra.mxu0 0.0
  %1172 = vmatpush.msra.mxu0 0.0
  %1173 = vmatpush.msra.mxu0 0.0
  %1174 = vmatpush.msra.mxu0 0.0
  %1175 = vmatpush.msra.mxu0 0.0
  %1176 = vmatpush.msra.mxu0 0.0
  %1177 = vmatpush.msra.mxu0 0.0
  %1178 = vmatpush.msra.mxu0 0.0
  %1179 = vmatpush.msra.mxu0 0.0
  %1180 = vmatpush.msra.mxu0 0.0
  %1181 = vmatpush.msra.mxu0 %v847
  %1182 = vmatpush.msra.mxu0 %v846
  %1183 = vmatpush.msra.mxu0 %v845
  %1184 = vmatpush.msra.mxu0 %v844
  %1185 = vmatmul.f32.gmra.mxu0 %v1167
  %v1186 = vpop.f32.mrf.mxu0
  %v1187 = vadd.f32 0.0, %v1186
  %1188 = vdwg.mxu0
  %v1189 = vadd.f32 %v1163, %v1187
  %v1190 = vxor.u32 %v1189, 2147483648
  %v1191 = vmul.f32 %v1190, 1.442695
  %v1192 = vpow.pop %v1191
  %v1193 = vadd.f32 %v1192, 1.0
  %v1194 = vrcp.pop %v1193
  %v1195 = vmul.f32 %v1193, %v1194
  %v1196 = vsub.f32 1.0, %v1195
  %v1197 = vmul.f32 %v1194, %v1196
  %v1198 = vadd.f32 %v1194, %v1197
  %vm1199 = vweird.f32 %v1193
  %vm1200 = vweird.f32 %v1194
  %vm1201 = vmor %vm1199, %vm1200
  %v1202 = vsel %vm1201, %v1194, %v1198
  %v1203 = vand.u32 2147483647, %v1193
  %vm1204 = vcmp.eq.f32.partialorder %v1203, 8.507059e+37
  %v1205 = vand.u32 %v1193, 2147483648
  %v1206 = vor.u32 1.1754944e-38, %v1205
  %v1207 = vsel %vm1204, %v1206, %v1202
  %v1208 = vmul.f32 1.0, %v1207
  %v1209 = vtanh.pop %v1189
  %v1210 = vmul.f32 %v1208, %v1156
  %1212 = vrot.lane.b32.xlu0 %v1209, 64
  %v1213 = vpop.permute.xlu0 %1212
  %v1215 = vmul.f32 %v1208, %v1213
  %1217 = vrot.lane.b32.xlu0 %v1215, 32
  %v1218 = vpop.permute.xlu0 %1217
  %v1220 = vadd.f32 %v1210, %v1218
  %v1221 = vtanh.pop %v1220
  %1223 = vrot.lane.b32.xlu0 %v1221, 64
  %v1224 = vpop.permute.xlu0 %1223
  %v1226 = vmul.f32 %v1208, %v1224
  %v1227 = vld [vmem:[#allocation3 + $0x30] sm:$0xff]
  %1229 = vrot.lane.b32.xlu0 %v1226, 32
  %v1230 = vpop.permute.xlu0 %1229
  %v1231 = vsel %vm129, %v1230, 0
  %1233 = vmatpush.msra.mxu0 0.0
  %1234 = vmatpush.msra.mxu0 0.0
  %1235 = vmatpush.msra.mxu0 0.0
  %1236 = vmatpush.msra.mxu0 0.0
  %1237 = vmatpush.msra.mxu0 0.0
  %1238 = vmatpush.msra.mxu0 0.0
  %1239 = vmatpush.msra.mxu0 0.0
  %1240 = vmatpush.msra.mxu0 0.0
  %1241 = vmatpush.msra.mxu0 0.0
  %1242 = vmatpush.msra.mxu0 0.0
  %1243 = vmatpush.msra.mxu0 0.0
  %1244 = vmatpush.msra.mxu0 0.0
  %1245 = vmatpush.msra.mxu0 %v847
  %1246 = vmatpush.msra.mxu0 %v846
  %1247 = vmatpush.msra.mxu0 %v845
  %1248 = vmatpush.msra.mxu0 %v844
  %1249 = vmatmul.f32.gmra.mxu0 %v1231
  %v1250 = vpop.f32.mrf.mxu0
  %v1251 = vadd.f32 0.0, %v1250
  %1252 = vdwg.mxu0
  %v1253 = vadd.f32 %v1227, %v1251
  %v1254 = vxor.u32 %v1253, 2147483648
  %v1255 = vmul.f32 %v1254, 1.442695
  %v1256 = vpow.pop %v1255
  %v1257 = vadd.f32 %v1256, 1.0
  %v1258 = vrcp.pop %v1257
  %v1259 = vmul.f32 %v1257, %v1258
  %v1260 = vsub.f32 1.0, %v1259
  %v1261 = vmul.f32 %v1258, %v1260
  %v1262 = vadd.f32 %v1258, %v1261
  %vm1263 = vweird.f32 %v1257
  %vm1264 = vweird.f32 %v1258
  %vm1265 = vmor %vm1263, %vm1264
  %v1266 = vsel %vm1265, %v1258, %v1262
  %v1267 = vand.u32 2147483647, %v1257
  %vm1268 = vcmp.eq.f32.partialorder %v1267, 8.507059e+37
  %v1269 = vand.u32 %v1257, 2147483648
  %v1270 = vor.u32 1.1754944e-38, %v1269
  %v1271 = vsel %vm1268, %v1270, %v1266
  %v1272 = vmul.f32 1.0, %v1271
  %v1273 = vtanh.pop %v1253
  %v1274 = vmul.f32 %v1272, %v1220
  %1276 = vrot.lane.b32.xlu0 %v1273, 64
  %v1277 = vpop.permute.xlu0 %1276
  %v1279 = vmul.f32 %v1272, %v1277
  %1281 = vrot.lane.b32.xlu0 %v1279, 32
  %v1282 = vpop.permute.xlu0 %1281
  %v1284 = vadd.f32 %v1274, %v1282
  %v1285 = vtanh.pop %v1284
  %1287 = vrot.lane.b32.xlu0 %v1285, 64
  %v1288 = vpop.permute.xlu0 %1287
  %v1290 = vmul.f32 %v1272, %v1288
  %v1291 = vld [vmem:[#allocation3 + $0x38] sm:$0xff]
  %1293 = vrot.lane.b32.xlu0 %v1290, 32
  %v1294 = vpop.permute.xlu0 %1293
  %v1295 = vsel %vm129, %v1294, 0
  %1297 = vmatpush.msra.mxu0 0.0
  %1298 = vmatpush.msra.mxu0 0.0
  %1299 = vmatpush.msra.mxu0 0.0
  %1300 = vmatpush.msra.mxu0 0.0
  %1301 = vmatpush.msra.mxu0 0.0
  %1302 = vmatpush.msra.mxu0 0.0
  %1303 = vmatpush.msra.mxu0 0.0
  %1304 = vmatpush.msra.mxu0 0.0
  %1305 = vmatpush.msra.mxu0 0.0
  %1306 = vmatpush.msra.mxu0 0.0
  %1307 = vmatpush.msra.mxu0 0.0
  %1308 = vmatpush.msra.mxu0 0.0
  %1309 = vmatpush.msra.mxu0 %v847
  %1310 = vmatpush.msra.mxu0 %v846
  %1311 = vmatpush.msra.mxu0 %v845
  %1312 = vmatpush.msra.mxu0 %v844
  %1313 = vmatmul.f32.gmra.mxu0 %v1295
  %v1314 = vpop.f32.mrf.mxu0
  %v1315 = vadd.f32 0.0, %v1314
  %1316 = vdwg.mxu0
  %v1317 = vadd.f32 %v1291, %v1315
  %v1318 = vxor.u32 %v1317, 2147483648
  %v1319 = vmul.f32 %v1318, 1.442695
  %v1320 = vpow.pop %v1319
  %v1321 = vadd.f32 %v1320, 1.0
  %v1322 = vrcp.pop %v1321
  %v1323 = vmul.f32 %v1321, %v1322
  %v1324 = vsub.f32 1.0, %v1323
  %v1325 = vmul.f32 %v1322, %v1324
  %v1326 = vadd.f32 %v1322, %v1325
  %vm1327 = vweird.f32 %v1321
  %vm1328 = vweird.f32 %v1322
  %vm1329 = vmor %vm1327, %vm1328
  %v1330 = vsel %vm1329, %v1322, %v1326
  %v1331 = vand.u32 2147483647, %v1321
  %vm1332 = vcmp.eq.f32.partialorder %v1331, 8.507059e+37
  %v1333 = vand.u32 %v1321, 2147483648
  %v1334 = vor.u32 1.1754944e-38, %v1333
  %v1335 = vsel %vm1332, %v1334, %v1330
  %v1336 = vmul.f32 1.0, %v1335
  %v1337 = vtanh.pop %v1317
  %v1338 = vmul.f32 %v1336, %v1284
  %1340 = vrot.lane.b32.xlu0 %v1337, 64
  %v1341 = vpop.permute.xlu0 %1340
  %v1343 = vmul.f32 %v1336, %v1341
  %1345 = vrot.lane.b32.xlu0 %v1343, 32
  %v1346 = vpop.permute.xlu0 %1345
  %v1348 = vadd.f32 %v1338, %v1346
  %v1349 = vtanh.pop %v1348
  %1351 = vrot.lane.b32.xlu0 %v1349, 64
  %v1352 = vpop.permute.xlu0 %1351
  %v1354 = vmul.f32 %v1336, %v1352
  %v1355 = vld [vmem:[%s7] sm:$0xff]
  %v1356 = vld [vmem:[%s7 + $0x8] sm:$0xff]
  %v1357 = vld [vmem:[%s7 + $0x10] sm:$0xff]
  %v1358 = vld [vmem:[%s7 + $0x18] sm:$0xff]
  %v1359 = vld [vmem:[%s8] sm:$0x1]
  %v1361 = vperm.slane %v1359, 0
  %1364 = vrot.lane.b32.xlu0 %v1354, 32
  %v1365 = vpop.permute.xlu0 %1364
  %v1366 = vsel %vm129, %v1365, 0
  %1368 = vmatpush.msra.mxu0 0.0
  %1369 = vmatpush.msra.mxu0 0.0
  %1370 = vmatpush.msra.mxu0 0.0
  %1371 = vmatpush.msra.mxu0 0.0
  %1372 = vmatpush.msra.mxu0 0.0
  %1373 = vmatpush.msra.mxu0 0.0
  %1374 = vmatpush.msra.mxu0 0.0
  %1375 = vmatpush.msra.mxu0 0.0
  %1376 = vmatpush.msra.mxu0 0.0
  %1377 = vmatpush.msra.mxu0 0.0
  %1378 = vmatpush.msra.mxu0 0.0
  %1379 = vmatpush.msra.mxu0 0.0
  %1380 = vmatpush.msra.mxu0 %v1358
  %1381 = vmatpush.msra.mxu0 %v1357
  %1382 = vmatpush.msra.mxu0 %v1356
  %1383 = vmatpush.msra.mxu0 %v1355
  %1384 = vmatmul.f32.gmra.mxu0 %v1366
  %v1385 = vpop.f32.mrf.mxu0
  %v1386 = vadd.f32 %v1361, %v1385
  %1387 = vdwg.mxu0
  %s1388 = scalar_lea.vmem %s9, 8
  %1389 = vst [vmem:[%s1388] sm:$0xff] %v1386
  // Predicated region
  $region38: #{lstm_model_forward.1} parent=0 // pred_check
    _
  $region39: #{lstm_model_forward.1} parent=0 // pred_check_branch
    %1391 = sbr.rel (0) target = $region41
  $region40: #{lstm_model_forward.1} parent=0 // pred_region
    _
  $region41: #{lstm_model_forward.1} parent=0 // pred_fallthru
    _
  // Predicated region
  $region42: #{lstm_model_forward.1} parent=0 // pred_check
    _
  $region43: #{lstm_model_forward.1} parent=0 // pred_check_branch
    %1393 = sbr.rel (0) target = $region45
  $region44: #{lstm_model_forward.1} parent=0 // pred_region
    _
  $region45: #{lstm_model_forward.1} parent=0 // pred_fallthru
    _

</llo_original>
